<compile_context>
chip_gen: v7x
topology: tpu7x:2x2x1
jax: 0.10.0
libtpu: 0.0.40
codegen_flags: <defaults>
</compile_context>

<pallas_src>
import jax
import jax.numpy as jnp
from jax.experimental import pallas as pl
from jax.experimental.pallas import tpu as pltpu


IN_DIM = 28 * 28          # 784
H1 = 512
H2 = 256
OUT = 1
OUT_PAD = 128             # lane-dense final layer / output store


def _round_up(x, m):
    return ((x + m - 1) // m) * m


def discriminator_kernel(x_ref, w1_ref, b1_ref, w2_ref, b2_ref, w3_ref, b3_ref,
                         o_ref):
    # x_ref:  (TILE_B, 784) f32  -> cast to bf16 in VMEM (few VPU cycles, free)
    # w1_ref: (784, 512) bf16, b1_ref: (1, 512) f32
    # w2_ref: (512, 256) bf16, b2_ref: (1, 256) f32
    # w3_ref: (256, 128) bf16 (cols 1..127 are zero), b3_ref: (1, 128) f32
    # o_ref:  (TILE_B, 128) f32
    x = x_ref[...].astype(jnp.bfloat16)

    h1 = jnp.dot(x, w1_ref[...], preferred_element_type=jnp.float32) + b1_ref[...]
    h1 = jnp.maximum(h1, 0.2 * h1).astype(jnp.bfloat16)          # LeakyReLU(0.2)

    h2 = jnp.dot(h1, w2_ref[...], preferred_element_type=jnp.float32) + b2_ref[...]
    h2 = jnp.maximum(h2, 0.2 * h2).astype(jnp.bfloat16)          # LeakyReLU(0.2)

    logits = jnp.dot(h2, w3_ref[...], preferred_element_type=jnp.float32) + b3_ref[...]

    # Sigmoid: exp on the EUP + approximate reciprocal on the EUP (free slots).
    o_ref[...] = pl.reciprocal(1.0 + jnp.exp(-logits), approx=True).astype(o_ref.dtype)


def discriminator_forward(img, params):
    """img: (B, 1, 28, 28) float32 (NCHW, like PyTorch).  Returns (B, 1) f32."""
    w1, b1, w2, b2, w3, b3 = params
    B = img.shape[0]

    # Flatten exactly like torch .view(B, -1).  No cast / feature pad here:
    # the kernel reads the raw f32 rows directly (K = 784 is a full-dim axis).
    x = img.reshape(B, -1)

    # bf16 weights (f32 accumulation on the MXU inside the kernel).  Only the
    # tiny final layer is padded to 128 output lanes.
    w1b = w1.astype(jnp.bfloat16)                                        # (784, 512)
    w2b = w2.astype(jnp.bfloat16)                                        # (512, 256)
    w3b = jnp.pad(w3, ((0, 0), (0, OUT_PAD - OUT))).astype(jnp.bfloat16)  # (256, 128)
    b3p = jnp.pad(b3, ((0, 0), (0, OUT_PAD - OUT)))                      # (1, 128) f32

    # Large batch tile to amortize per-grid-step pipeline overhead.
    TILE_B = min(1024, _round_up(B, 8))
    # v7x: keep >= 2 grid steps so ("parallel",) can shard across both TCs.
    if pl.cdiv(B, TILE_B) < 2 and TILE_B > 8:
        TILE_B = _round_up(TILE_B // 2, 8)
    nb = pl.cdiv(B, TILE_B)   # partial last block is fine: all math is per-row

    resident = lambda shape: pl.BlockSpec(shape, lambda i: (0, 0))

    out = pl.pallas_call(
        discriminator_kernel,
        out_shape=jax.ShapeDtypeStruct((B, OUT_PAD), jnp.float32),
        grid=(nb,),
        in_specs=[
            pl.BlockSpec((TILE_B, IN_DIM), lambda i: (i, 0)),
            resident((IN_DIM, H1)),
            resident((1, H1)),
            resident((H1, H2)),
            resident((1, H2)),
            resident((H2, OUT_PAD)),
            resident((1, OUT_PAD)),
        ],
        out_specs=pl.BlockSpec((TILE_B, OUT_PAD), lambda i: (i, 0)),
        compiler_params=pltpu.CompilerParams(
            dimension_semantics=("parallel",),
            vmem_limit_bytes=32 * 1024 * 1024,
        ),
    )(x, w1b, b1, w2b, b2, w3b, b3p)

    # Restore the (B, 1) contract (drop the 127 zero lanes).
    return out[:, :OUT]


def init_params(key):
    """Deterministic init mimicking torch.nn.Linear default:
    U(-1/sqrt(fan_in), 1/sqrt(fan_in)) for both weight and bias."""
    ks = jax.random.split(key, 6)

    def linear(kw, kb, fan_in, fan_out):
        bound = 1.0 / jnp.sqrt(jnp.float32(fan_in))
        # Stored as (fan_in, fan_out) so the kernel does x @ W + b.
        w = jax.random.uniform(kw, (fan_in, fan_out), jnp.float32, -bound, bound)
        b = jax.random.uniform(kb, (1, fan_out), jnp.float32, -bound, bound)
        return w, b

    w1, b1 = linear(ks[0], ks[1], IN_DIM, H1)
    w2, b2 = linear(ks[2], ks[3], H1, H2)
    w3, b3 = linear(ks[4], ks[5], H2, OUT)
    return (w1, b1, w2, b2, w3, b3)


if __name__ == "__main__":
    key = jax.random.PRNGKey(0)
    k_img, k_params = jax.random.split(key)

    B = 2
    img = jax.random.normal(k_img, (B, 1, 28, 28), dtype=jnp.float32)  # NCHW
    params = init_params(k_params)

    out = discriminator_forward(img, params)
    out = jax.block_until_ready(out)
    assert out.shape == (B, OUT)

    # Reference in plain JAX, mirroring the kernel's mixed precision
    # (bf16 operands for the dots, f32 accumulation + bias).
    def leaky(v):
        return jnp.maximum(v, 0.2 * v)

    w1, b1, w2, b2, w3, b3 = params
    xr = img.reshape(B, -1).astype(jnp.bfloat16)
    h = jnp.dot(xr, w1.astype(jnp.bfloat16), preferred_element_type=jnp.float32) + b1
    h = leaky(h).astype(jnp.bfloat16)
    h = jnp.dot(h, w2.astype(jnp.bfloat16), preferred_element_type=jnp.float32) + b2
    h = leaky(h).astype(jnp.bfloat16)
    logits = jnp.dot(h, w3.astype(jnp.bfloat16), preferred_element_type=jnp.float32) + b3
    ref = jax.nn.sigmoid(logits)
    # Tolerance covers the EUP approx-reciprocal (~1e-3 relative on (0, 1)).
    assert jnp.allclose(out, ref, atol=5e-3, rtol=5e-3)

    # Loose check against the pure-f32 PyTorch-equivalent math (bf16
    # quantization error only).
    hf = leaky(img.reshape(B, -1) @ w1 + b1)
    hf = leaky(hf @ w2 + b2)
    ref32 = jax.nn.sigmoid(hf @ w3 + b3)
    assert jnp.allclose(out, ref32, atol=3e-2)

    print("KERNEL_OK")
</pallas_src>

<mosaic_0001>
module attributes {stable_mosaic.version = 11 : i64} {
  func.func @discriminator_kernel(%arg0: i32, %arg1: memref<8x784xf32, #tpu.memory_space<vmem>>, %arg2: memref<784x512xbf16, #tpu.memory_space<vmem>>, %arg3: memref<1x512xf32, #tpu.memory_space<vmem>>, %arg4: memref<512x256xbf16, #tpu.memory_space<vmem>>, %arg5: memref<1x256xf32, #tpu.memory_space<vmem>>, %arg6: memref<256x128xbf16, #tpu.memory_space<vmem>>, %arg7: memref<1x128xf32, #tpu.memory_space<vmem>>, %arg8: memref<8x128xf32, #tpu.memory_space<vmem>>) attributes {dimension_semantics = [#tpu.dimension_semantics<parallel>], iteration_bounds = array<i64: 1>, scalar_prefetch = 0 : i64, scratch_operands = 0 : i64, tpu.core_type = #tpu.core_type<tc>, window_params = [{transform_indices = @transform_0, window_bounds = array<i64: 8, 784>}, {pipeline_mode = #tpu.pipeline_mode<synchronous>, transform_indices = @transform_1, window_bounds = array<i64: 784, 512>}, {pipeline_mode = #tpu.pipeline_mode<synchronous>, transform_indices = @transform_2, window_bounds = array<i64: 1, 512>}, {pipeline_mode = #tpu.pipeline_mode<synchronous>, transform_indices = @transform_3, window_bounds = array<i64: 512, 256>}, {pipeline_mode = #tpu.pipeline_mode<synchronous>, transform_indices = @transform_4, window_bounds = array<i64: 1, 256>}, {pipeline_mode = #tpu.pipeline_mode<synchronous>, transform_indices = @transform_5, window_bounds = array<i64: 256, 128>}, {pipeline_mode = #tpu.pipeline_mode<synchronous>, transform_indices = @transform_6, window_bounds = array<i64: 1, 128>}, {transform_indices = @transform_7, window_bounds = array<i64: 8, 128>}]} {
    %c0 = arith.constant 0 : index
    %c0_0 = arith.constant 0 : index
    %0 = vector.load %arg1[%c0, %c0_0] : memref<8x784xf32, #tpu.memory_space<vmem>>, vector<8x784xf32>
    %1 = arith.truncf %0 : vector<8x784xf32> to vector<8x784xbf16>
    %c0_1 = arith.constant 0 : index
    %c0_2 = arith.constant 0 : index
    %2 = vector.load %arg2[%c0_1, %c0_2] : memref<784x512xbf16, #tpu.memory_space<vmem>>, vector<784x512xbf16>
    %cst = arith.constant dense<0.000000e+00> : vector<8x512xf32>
    %3 = tpu.matmul %1, %2, %cst {dimension_numbers = #tpu.dot_dimension_numbers<[1], [0], [0], [1], [0, 0, 1, 1], [], []>} : vector<8x784xbf16>, vector<784x512xbf16>, vector<8x512xf32> -> vector<8x512xf32>
    %c0_3 = arith.constant 0 : index
    %c0_4 = arith.constant 0 : index
    %4 = vector.load %arg3[%c0_3, %c0_4] : memref<1x512xf32, #tpu.memory_space<vmem>>, vector<1x512xf32>
    %5 = vector.broadcast %4 : vector<1x512xf32> to vector<8x512xf32>
    %6 = arith.addf %3, %5 : vector<8x512xf32>
    %cst_5 = arith.constant 2.000000e-01 : f32
    %7 = vector.broadcast %cst_5 : f32 to vector<8x512xf32>
    %8 = arith.mulf %7, %6 : vector<8x512xf32>
    %9 = arith.maximumf %6, %8 : vector<8x512xf32>
    %10 = arith.truncf %9 : vector<8x512xf32> to vector<8x512xbf16>
    %c0_6 = arith.constant 0 : index
    %c0_7 = arith.constant 0 : index
    %11 = vector.load %arg4[%c0_6, %c0_7] : memref<512x256xbf16, #tpu.memory_space<vmem>>, vector<512x256xbf16>
    %cst_8 = arith.constant dense<0.000000e+00> : vector<8x256xf32>
    %12 = tpu.matmul %10, %11, %cst_8 {dimension_numbers = #tpu.dot_dimension_numbers<[1], [0], [0], [1], [0, 0, 1, 1], [], []>} : vector<8x512xbf16>, vector<512x256xbf16>, vector<8x256xf32> -> vector<8x256xf32>
    %c0_9 = arith.constant 0 : index
    %c0_10 = arith.constant 0 : index
    %13 = vector.load %arg5[%c0_9, %c0_10] : memref<1x256xf32, #tpu.memory_space<vmem>>, vector<1x256xf32>
    %14 = vector.broadcast %13 : vector<1x256xf32> to vector<8x256xf32>
    %15 = arith.addf %12, %14 : vector<8x256xf32>
    %cst_11 = arith.constant 2.000000e-01 : f32
    %16 = vector.broadcast %cst_11 : f32 to vector<8x256xf32>
    %17 = arith.mulf %16, %15 : vector<8x256xf32>
    %18 = arith.maximumf %15, %17 : vector<8x256xf32>
    %19 = arith.truncf %18 : vector<8x256xf32> to vector<8x256xbf16>
    %c0_12 = arith.constant 0 : index
    %c0_13 = arith.constant 0 : index
    %20 = vector.load %arg6[%c0_12, %c0_13] : memref<256x128xbf16, #tpu.memory_space<vmem>>, vector<256x128xbf16>
    %cst_14 = arith.constant dense<0.000000e+00> : vector<8x128xf32>
    %21 = tpu.matmul %19, %20, %cst_14 {dimension_numbers = #tpu.dot_dimension_numbers<[1], [0], [0], [1], [0, 0, 1, 1], [], []>} : vector<8x256xbf16>, vector<256x128xbf16>, vector<8x128xf32> -> vector<8x128xf32>
    %c0_15 = arith.constant 0 : index
    %c0_16 = arith.constant 0 : index
    %22 = vector.load %arg7[%c0_15, %c0_16] : memref<1x128xf32, #tpu.memory_space<vmem>>, vector<1x128xf32>
    %23 = vector.broadcast %22 : vector<1x128xf32> to vector<8x128xf32>
    %24 = arith.addf %21, %23 : vector<8x128xf32>
    %cst_17 = arith.constant 0.000000e+00 : f32
    %25 = vector.broadcast %cst_17 : f32 to vector<8x128xf32>
    %26 = arith.subf %25, %24 : vector<8x128xf32>
    %27 = math.exp %26 : vector<8x128xf32>
    %cst_18 = arith.constant 1.000000e+00 : f32
    %28 = vector.broadcast %cst_18 : f32 to vector<8x128xf32>
    %29 = arith.addf %28, %27 : vector<8x128xf32>
    %30 = tpu.reciprocal %29 {approx = true} : vector<8x128xf32> -> vector<8x128xf32>
    %c0_19 = arith.constant 0 : index
    %c0_20 = arith.constant 0 : index
    %31 = vector.load %arg8[%c0_19, %c0_20] : memref<8x128xf32, #tpu.memory_space<vmem>>, vector<8x128xf32>
    tpu.vector_store %arg8[%c0_19, %c0_20], %30 {strides = array<i32>} : memref<8x128xf32, #tpu.memory_space<vmem>>, vector<8x128xf32>,
    return
  }
  func.func @transform_0(%arg0: i32) -> (i32, i32) {
    %c0_i32 = arith.constant 0 : i32
    %c0_i32_0 = arith.constant 0 : i32
    return %arg0, %c0_i32 : i32, i32
  }
  func.func @transform_1(%arg0: i32) -> (i32, i32) {
    %c0_i32 = arith.constant 0 : i32
    %c0_i32_0 = arith.constant 0 : i32
    %c0_i32_1 = arith.constant 0 : i32
    return %c0_i32, %c0_i32_0 : i32, i32
  }
  func.func @transform_2(%arg0: i32) -> (i32, i32) {
    %c0_i32 = arith.constant 0 : i32
    %c0_i32_0 = arith.constant 0 : i32
    %c0_i32_1 = arith.constant 0 : i32
    return %c0_i32, %c0_i32_0 : i32, i32
  }
  func.func @transform_3(%arg0: i32) -> (i32, i32) {
    %c0_i32 = arith.constant 0 : i32
    %c0_i32_0 = arith.constant 0 : i32
    %c0_i32_1 = arith.constant 0 : i32
    return %c0_i32, %c0_i32_0 : i32, i32
  }
  func.func @transform_4(%arg0: i32) -> (i32, i32) {
    %c0_i32 = arith.constant 0 : i32
    %c0_i32_0 = arith.constant 0 : i32
    %c0_i32_1 = arith.constant 0 : i32
    return %c0_i32, %c0_i32_0 : i32, i32
  }
  func.func @transform_5(%arg0: i32) -> (i32, i32) {
    %c0_i32 = arith.constant 0 : i32
    %c0_i32_0 = arith.constant 0 : i32
    %c0_i32_1 = arith.constant 0 : i32
    return %c0_i32, %c0_i32_0 : i32, i32
  }
  func.func @transform_6(%arg0: i32) -> (i32, i32) {
    %c0_i32 = arith.constant 0 : i32
    %c0_i32_0 = arith.constant 0 : i32
    %c0_i32_1 = arith.constant 0 : i32
    return %c0_i32, %c0_i32_0 : i32, i32
  }
  func.func @transform_7(%arg0: i32) -> (i32, i32) {
    %c0_i32 = arith.constant 0 : i32
    %c0_i32_0 = arith.constant 0 : i32
    return %arg0, %c0_i32 : i32, i32
  }
}

</mosaic_0001>

<llo_original>
// kernel: tpu_custom_call.1
$region0: #{tpu_custom_call.1}
  #allocation0 [shape = 'u32[]', space=smem, size = 0x4, offset = 0x4, fixed_abs, tag = 'smem constant byte address 0x4 - core index']
  #allocation1 [shape = 'u32[144,128]{1,0:T(1,128)}', space=vmem, size = 0x12000, scoped, tag = 'internal scratch']
  %s0 = inlined_call_operand.hbm [shape: f32[2,784], index: 0, kind: input, shape index: {}]
  %s1 = inlined_call_operand.hbm [shape: bf16[784,512], index: 1, kind: input, shape index: {}]
  %s2 = inlined_call_operand.vmem [shape: f32[1,512], index: 2, kind: input, shape index: {}]
  %s3 = inlined_call_operand.hbm [shape: bf16[512,256], index: 3, kind: input, shape index: {}]
  %s4 = inlined_call_operand.vmem [shape: f32[1,256], index: 4, kind: input, shape index: {}]
  %s5 = inlined_call_operand.hbm [shape: bf16[256,128], index: 5, kind: input, shape index: {}]
  %s6 = inlined_call_operand.vmem [shape: f32[1,128], index: 6, kind: input, shape index: {}]
  %s7 = inlined_call_operand.hbm [shape: f32[2,128], index: 7, kind: output, shape index: {}]
  %s8 = sld [smem:[#allocation0]]
  $region54: #{tpu_custom_call.1} parent=0
    _
  %s10 = ssub.s32 1, %s8
  %s11 = scalar_select 0, %s10, %s8
  $region1: #{tpu_custom_call.1} parent=0
    #allocation2 [shape = 'u8[28672]{0}', space=vmem, size = 0x7000, scoped, tag = 'input window, operand 0, single buffered']
    #allocation3 [shape = 's32[1]{0}', space=sflag, size = 0x4, scoped, tag = 'scoped memory for tpu_custom_call.1']
    #allocation4 [shape = 's32[1]{0}', space=sflag, size = 0x4, scoped, tag = 'scoped memory for tpu_custom_call.1']
    #allocation5 [shape = 'u8[802816]{0}', space=vmem, size = 0xc4000, scoped, tag = 'input window, operand 1, single buffered']
    #allocation6 [shape = 's32[1]{0}', space=sflag, size = 0x4, scoped, tag = 'scoped memory for tpu_custom_call.1']
    #allocation7 [shape = 'u8[262144]{0}', space=vmem, size = 0x40000, scoped, tag = 'input window, operand 3, single buffered']
    #allocation8 [shape = 'u8[65536]{0}', space=vmem, size = 0x10000, scoped, tag = 'input window, operand 5, single buffered']
    #allocation9 [shape = 's32[1]{0}', space=sflag, size = 0x4, scoped, tag = 'scoped memory for tpu_custom_call.1']
    #allocation10 [shape = 'u8[4096]{0}', space=vmem, size = 0x1000, scoped, tag = 'output window, operand 0, single buffered']
    %12 = vsyncpa [#allocation3], 0
    %13 = vsyncpa [#allocation6], 0
    %14 = vsyncpa [#allocation9], 0
    %15 = vsyncpa [#allocation4], 0
    // Predicated region
    $region2: #{tpu_custom_call.1} parent=1 // pred_check
      _
    $region3: #{tpu_custom_call.1} parent=1 // pred_check_branch
      %17 = sbr.rel (0) target = $region5
    $region4: #{tpu_custom_call.1} parent=1 // pred_region
      %s19 = ssub.s32 896, 224
      %20 = vsyncadd [#allocation3], %s19
      %s21 = sshll.u32 [#allocation2], 4
      %s22 = int_to_ptr.vmem [resolvable:$true] %s21
      %27 = dma.hbm_to_vmem [thread:$0]  %s0, 224, %s22, [#allocation3], 224, 224, 14
    $region5: #{tpu_custom_call.1} parent=1 // pred_fallthru
      _
    // Predicated region
    $region6: #{tpu_custom_call.1} parent=1 // pred_check
      _
    $region7: #{tpu_custom_call.1} parent=1 // pred_check_branch
      %29 = sbr.rel (0) target = $region9
    $region8: #{tpu_custom_call.1} parent=1 // pred_region
      %s31 = ssub.s32 25088, 25088
      %32 = vsyncadd [#allocation6], %s31
      %s33 = sshll.u32 [#allocation5], 4
      %s34 = int_to_ptr.vmem [resolvable:$true] %s33
      %39 = dma.hbm_to_vmem [thread:$0]  %s1, 25088, %s34, [#allocation6], 256, 256, 16
    $region9: #{tpu_custom_call.1} parent=1 // pred_fallthru
      _
    // Predicated region
    $region10: #{tpu_custom_call.1} parent=1 // pred_check
      _
    $region11: #{tpu_custom_call.1} parent=1 // pred_check_branch
      %41 = sbr.rel (0) target = $region13
    $region12: #{tpu_custom_call.1} parent=1 // pred_region
      _
    $region13: #{tpu_custom_call.1} parent=1 // pred_fallthru
      _
    // Predicated region
    $region14: #{tpu_custom_call.1} parent=1 // pred_check
      _
    $region15: #{tpu_custom_call.1} parent=1 // pred_check_branch
      %43 = sbr.rel (0) target = $region17
    $region16: #{tpu_custom_call.1} parent=1 // pred_region
      %s45 = ssub.s32 8192, 8192
      %46 = vsyncadd [#allocation6], %s45
      %s47 = sshll.u32 [#allocation7], 4
      %s48 = int_to_ptr.vmem [resolvable:$true] %s47
      %53 = dma.hbm_to_vmem [thread:$0]  %s3, 8192, %s48, [#allocation6], 128, 128, 8
    $region17: #{tpu_custom_call.1} parent=1 // pred_fallthru
      _
    // Predicated region
    $region18: #{tpu_custom_call.1} parent=1 // pred_check
      _
    $region19: #{tpu_custom_call.1} parent=1 // pred_check_branch
      %55 = sbr.rel (0) target = $region21
    $region20: #{tpu_custom_call.1} parent=1 // pred_region
      _
    $region21: #{tpu_custom_call.1} parent=1 // pred_fallthru
      _
    // Predicated region
    $region22: #{tpu_custom_call.1} parent=1 // pred_check
      _
    $region23: #{tpu_custom_call.1} parent=1 // pred_check_branch
      %57 = sbr.rel (0) target = $region25
    $region24: #{tpu_custom_call.1} parent=1 // pred_region
      %s59 = ssub.s32 2048, 2048
      %60 = vsyncadd [#allocation9], %s59
      %s61 = sshll.u32 [#allocation8], 4
      %s62 = int_to_ptr.vmem [resolvable:$true] %s61
      %67 = dma.hbm_to_vmem [thread:$0]  %s5, 2048, %s62, [#allocation9], 64, 64, 4
    $region25: #{tpu_custom_call.1} parent=1 // pred_fallthru
      _
    // Predicated region
    $region26: #{tpu_custom_call.1} parent=1 // pred_check
      _
    $region27: #{tpu_custom_call.1} parent=1 // pred_check_branch
      %69 = sbr.rel (0) target = $region29
    $region28: #{tpu_custom_call.1} parent=1 // pred_region
      _
    $region29: #{tpu_custom_call.1} parent=1 // pred_fallthru
      _
    // Predicated region
    $region30: #{tpu_custom_call.1} parent=1 // pred_check
      _
    $region31: #{tpu_custom_call.1} parent=1 // pred_check_branch
      %71 = sbr.rel (0) target = $region33
    $region32: #{tpu_custom_call.1} parent=1 // pred_region
      %72 = dma.done [#allocation3], 896
    $region33: #{tpu_custom_call.1} parent=1 // pred_fallthru
      _
    // Predicated region
    $region34: #{tpu_custom_call.1} parent=1 // pred_check
      _
    $region35: #{tpu_custom_call.1} parent=1 // pred_check_branch
      %74 = sbr.rel (0) target = $region37
    $region36: #{tpu_custom_call.1} parent=1 // pred_region
      %75 = dma.done [#allocation6], 25088
    $region37: #{tpu_custom_call.1} parent=1 // pred_fallthru
      _
    // Predicated region
    $region38: #{tpu_custom_call.1} parent=1 // pred_check
      _
    $region39: #{tpu_custom_call.1} parent=1 // pred_check_branch
      %77 = sbr.rel (0) target = $region41
    $region40: #{tpu_custom_call.1} parent=1 // pred_region
      %78 = dma.done [#allocation6], 8192
    $region41: #{tpu_custom_call.1} parent=1 // pred_fallthru
      _
    // Predicated region
    $region42: #{tpu_custom_call.1} parent=1 // pred_check
      _
    $region43: #{tpu_custom_call.1} parent=1 // pred_check_branch
      %80 = sbr.rel (0) target = $region45
    $region44: #{tpu_custom_call.1} parent=1 // pred_region
      %81 = dma.done [#allocation9], 2048
    $region45: #{tpu_custom_call.1} parent=1 // pred_fallthru
      _
    %v83 = vld [vmem:[#allocation2] sm:$0xff]
    %v84 = vld [vmem:[#allocation2 + $0x8] sm:$0x3f]
    %v85 = vld [vmem:[#allocation2 + $0xe] sm:$0xff]
    %v86 = vld [vmem:[#allocation2 + $0x16] sm:$0x3f]
    %v87 = vld [vmem:[#allocation2 + $0x1c] sm:$0xff]
    %v88 = vld [vmem:[#allocation2 + $0x24] sm:$0x3f]
    %v89 = vld [vmem:[#allocation2 + $0x2a] sm:$0xff]
    %v90 = vld [vmem:[#allocation2 + $0x32] sm:$0x3f]
    %v99 = vcombine.low %v83, %v85
    %v100 = vcombine.high %v83, %v85
    %v101 = vcombine.low %v87, %v89
    %v102 = vcombine.high %v87, %v89
    %v104 = vunpack.c.l.s4 1983009808
    %v105 = vunpack.c.0.s8 %v104
    %v106 = vlaneseq
    %v107 = vshrl.u32 %v106, 7
    %v108 = vsub.s32 %v105, %v107
    %v109 = vrot.slane %v99, %v108
    %v111 = vunpack.c.l.s4 1983009808
    %v112 = vunpack.c.0.s8 %v111
    %v113 = vlaneseq
    %v114 = vshrl.u32 %v113, 7
    %v115 = vsub.s32 %v112, %v114
    %v116 = vrot.slane %v100, %v115
    %v118 = vunpack.c.l.s4 1983009808
    %v119 = vunpack.c.0.s8 %v118
    %v120 = vlaneseq
    %v121 = vshrl.u32 %v120, 7
    %v122 = vsub.s32 %v119, %v121
    %v123 = vrot.slane %v101, %v122
    %v125 = vunpack.c.l.s4 1983009808
    %v126 = vunpack.c.0.s8 %v125
    %v127 = vlaneseq
    %v128 = vshrl.u32 %v127, 7
    %v129 = vsub.s32 %v126, %v128
    %v130 = vrot.slane %v102, %v129
    %v131 = vcombine.low %v109, %v123
    %v132 = vcombine.high %v109, %v123
    %v133 = vcombine.low %v116, %v130
    %v134 = vcombine.high %v116, %v130
    %v135 = vcombine.low %v84, %v86
    %v136 = vcombine.high %v84, %v86
    %v137 = vcombine.low %v88, %v90
    %v138 = vcombine.high %v88, %v90
    %v140 = vunpack.c.l.s4 1983009808
    %v141 = vunpack.c.0.s8 %v140
    %v142 = vlaneseq
    %v143 = vshrl.u32 %v142, 7
    %v144 = vsub.s32 %v141, %v143
    %v145 = vrot.slane %v135, %v144
    %v147 = vunpack.c.l.s4 1983009808
    %v148 = vunpack.c.0.s8 %v147
    %v149 = vlaneseq
    %v150 = vshrl.u32 %v149, 7
    %v151 = vsub.s32 %v148, %v150
    %v152 = vrot.slane %v136, %v151
    %v154 = vunpack.c.l.s4 1983009808
    %v155 = vunpack.c.0.s8 %v154
    %v156 = vlaneseq
    %v157 = vshrl.u32 %v156, 7
    %v158 = vsub.s32 %v155, %v157
    %v159 = vrot.slane %v137, %v158
    %v161 = vunpack.c.l.s4 1983009808
    %v162 = vunpack.c.0.s8 %v161
    %v163 = vlaneseq
    %v164 = vshrl.u32 %v163, 7
    %v165 = vsub.s32 %v162, %v164
    %v166 = vrot.slane %v138, %v165
    %v167 = vcombine.low %v145, %v159
    %v168 = vcombine.high %v145, %v159
    %v169 = vcombine.low %v152, %v166
    %v177 = vpack.c.bf16 %v131, %v131
    %v178 = vpack.c.bf16 %v132, %v132
    %v179 = vpack.c.bf16 %v133, %v133
    %v180 = vpack.c.bf16 %v134, %v134
    %v181 = vpack.c.bf16 %v167, %v167
    %v182 = vpack.c.bf16 %v168, %v168
    %v183 = vpack.c.bf16 %v169, %v169
    %v184 = vld [vmem:[#allocation5] sm:$0xff]
    %v185 = vld [vmem:[#allocation5 + $0x8] sm:$0xff]
    %v186 = vld [vmem:[#allocation5 + $0x10] sm:$0xff]
    %v187 = vld [vmem:[#allocation5 + $0x18] sm:$0xff]
    %v188 = vld [vmem:[#allocation5 + $0x20] sm:$0xff]
    %v189 = vld [vmem:[#allocation5 + $0x28] sm:$0xff]
    %v190 = vld [vmem:[#allocation5 + $0x30] sm:$0xff]
    %v191 = vld [vmem:[#allocation5 + $0x38] sm:$0xff]
    %v192 = vld [vmem:[#allocation5 + $0x40] sm:$0xff]
    %v193 = vld [vmem:[#allocation5 + $0x48] sm:$0xff]
    %v194 = vld [vmem:[#allocation5 + $0x50] sm:$0xff]
    %v195 = vld [vmem:[#allocation5 + $0x58] sm:$0xff]
    %v196 = vld [vmem:[#allocation5 + $0x60] sm:$0xff]
    %v197 = vld [vmem:[#allocation5 + $0x68] sm:$0xff]
    %v198 = vld [vmem:[#allocation5 + $0x70] sm:$0xff]
    %v199 = vld [vmem:[#allocation5 + $0x78] sm:$0xff]
    %v200 = vld [vmem:[#allocation5 + $0x80] sm:$0xff]
    %v201 = vld [vmem:[#allocation5 + $0x88] sm:$0xff]
    %v202 = vld [vmem:[#allocation5 + $0x90] sm:$0xff]
    %v203 = vld [vmem:[#allocation5 + $0x98] sm:$0xff]
    %v204 = vld [vmem:[#allocation5 + $0xa0] sm:$0xff]
    %v205 = vld [vmem:[#allocation5 + $0xa8] sm:$0xff]
    %v206 = vld [vmem:[#allocation5 + $0xb0] sm:$0xff]
    %v207 = vld [vmem:[#allocation5 + $0xb8] sm:$0xff]
    %v208 = vld [vmem:[#allocation5 + $0xc0] sm:$0xff]
    %v209 = vld [vmem:[#allocation5 + $0xc8] sm:$0xff]
    %v210 = vld [vmem:[#allocation5 + $0xd0] sm:$0xff]
    %v211 = vld [vmem:[#allocation5 + $0xd8] sm:$0xff]
    %v212 = vld [vmem:[#allocation5 + $0xe0] sm:$0xff]
    %v213 = vld [vmem:[#allocation5 + $0xe8] sm:$0xff]
    %v214 = vld [vmem:[#allocation5 + $0xf0] sm:$0xff]
    %v215 = vld [vmem:[#allocation5 + $0xf8] sm:$0xff]
    %v216 = vld [vmem:[#allocation5 + $0x100] sm:$0xff]
    %v217 = vld [vmem:[#allocation5 + $0x108] sm:$0xff]
    %v218 = vld [vmem:[#allocation5 + $0x110] sm:$0xff]
    %v219 = vld [vmem:[#allocation5 + $0x118] sm:$0xff]
    %v220 = vld [vmem:[#allocation5 + $0x120] sm:$0xff]
    %v221 = vld [vmem:[#allocation5 + $0x128] sm:$0xff]
    %v222 = vld [vmem:[#allocation5 + $0x130] sm:$0xff]
    %v223 = vld [vmem:[#allocation5 + $0x138] sm:$0xff]
    %v224 = vld [vmem:[#allocation5 + $0x140] sm:$0xff]
    %v225 = vld [vmem:[#allocation5 + $0x148] sm:$0xff]
    %v226 = vld [vmem:[#allocation5 + $0x150] sm:$0xff]
    %v227 = vld [vmem:[#allocation5 + $0x158] sm:$0xff]
    %v228 = vld [vmem:[#allocation5 + $0x160] sm:$0xff]
    %v229 = vld [vmem:[#allocation5 + $0x168] sm:$0xff]
    %v230 = vld [vmem:[#allocation5 + $0x170] sm:$0xff]
    %v231 = vld [vmem:[#allocation5 + $0x178] sm:$0xff]
    %v232 = vld [vmem:[#allocation5 + $0x180] sm:$0xff]
    %v233 = vld [vmem:[#allocation5 + $0x188] sm:$0xff]
    %v234 = vld [vmem:[#allocation5 + $0x190] sm:$0xff]
    %v235 = vld [vmem:[#allocation5 + $0x198] sm:$0xff]
    %v236 = vld [vmem:[#allocation5 + $0x1a0] sm:$0xff]
    %v237 = vld [vmem:[#allocation5 + $0x1a8] sm:$0xff]
    %v238 = vld [vmem:[#allocation5 + $0x1b0] sm:$0xff]
    %v239 = vld [vmem:[#allocation5 + $0x1b8] sm:$0xff]
    %v240 = vld [vmem:[#allocation5 + $0x1c0] sm:$0xff]
    %v241 = vld [vmem:[#allocation5 + $0x1c8] sm:$0xff]
    %v242 = vld [vmem:[#allocation5 + $0x1d0] sm:$0xff]
    %v243 = vld [vmem:[#allocation5 + $0x1d8] sm:$0xff]
    %v244 = vld [vmem:[#allocation5 + $0x1e0] sm:$0xff]
    %v245 = vld [vmem:[#allocation5 + $0x1e8] sm:$0xff]
    %v246 = vld [vmem:[#allocation5 + $0x1f0] sm:$0xff]
    %v247 = vld [vmem:[#allocation5 + $0x1f8] sm:$0xff]
    %v248 = vld [vmem:[#allocation5 + $0x200] sm:$0xff]
    %v249 = vld [vmem:[#allocation5 + $0x208] sm:$0xff]
    %v250 = vld [vmem:[#allocation5 + $0x210] sm:$0xff]
    %v251 = vld [vmem:[#allocation5 + $0x218] sm:$0xff]
    %v252 = vld [vmem:[#allocation5 + $0x220] sm:$0xff]
    %v253 = vld [vmem:[#allocation5 + $0x228] sm:$0xff]
    %v254 = vld [vmem:[#allocation5 + $0x230] sm:$0xff]
    %v255 = vld [vmem:[#allocation5 + $0x238] sm:$0xff]
    %v256 = vld [vmem:[#allocation5 + $0x240] sm:$0xff]
    %v257 = vld [vmem:[#allocation5 + $0x248] sm:$0xff]
    %v258 = vld [vmem:[#allocation5 + $0x250] sm:$0xff]
    %v259 = vld [vmem:[#allocation5 + $0x258] sm:$0xff]
    %v260 = vld [vmem:[#allocation5 + $0x260] sm:$0xff]
    %v261 = vld [vmem:[#allocation5 + $0x268] sm:$0xff]
    %v262 = vld [vmem:[#allocation5 + $0x270] sm:$0xff]
    %v263 = vld [vmem:[#allocation5 + $0x278] sm:$0xff]
    %v264 = vld [vmem:[#allocation5 + $0x280] sm:$0xff]
    %v265 = vld [vmem:[#allocation5 + $0x288] sm:$0xff]
    %v266 = vld [vmem:[#allocation5 + $0x290] sm:$0xff]
    %v267 = vld [vmem:[#allocation5 + $0x298] sm:$0xff]
    %v268 = vld [vmem:[#allocation5 + $0x2a0] sm:$0xff]
    %v269 = vld [vmem:[#allocation5 + $0x2a8] sm:$0xff]
    %v270 = vld [vmem:[#allocation5 + $0x2b0] sm:$0xff]
    %v271 = vld [vmem:[#allocation5 + $0x2b8] sm:$0xff]
    %v272 = vld [vmem:[#allocation5 + $0x2c0] sm:$0xff]
    %v273 = vld [vmem:[#allocation5 + $0x2c8] sm:$0xff]
    %v274 = vld [vmem:[#allocation5 + $0x2d0] sm:$0xff]
    %v275 = vld [vmem:[#allocation5 + $0x2d8] sm:$0xff]
    %v276 = vld [vmem:[#allocation5 + $0x2e0] sm:$0xff]
    %v277 = vld [vmem:[#allocation5 + $0x2e8] sm:$0xff]
    %v278 = vld [vmem:[#allocation5 + $0x2f0] sm:$0xff]
    %v279 = vld [vmem:[#allocation5 + $0x2f8] sm:$0xff]
    %v280 = vld [vmem:[#allocation5 + $0x300] sm:$0xff]
    %v281 = vld [vmem:[#allocation5 + $0x308] sm:$0xff]
    %v282 = vld [vmem:[#allocation5 + $0x310] sm:$0xff]
    %v283 = vld [vmem:[#allocation5 + $0x318] sm:$0xff]
    %v284 = vld [vmem:[#allocation5 + $0x320] sm:$0xff]
    %v285 = vld [vmem:[#allocation5 + $0x328] sm:$0xff]
    %v286 = vld [vmem:[#allocation5 + $0x330] sm:$0xff]
    %v287 = vld [vmem:[#allocation5 + $0x338] sm:$0xff]
    %v288 = vld [vmem:[#allocation5 + $0x340] sm:$0xff]
    %v289 = vld [vmem:[#allocation5 + $0x348] sm:$0xff]
    %v290 = vld [vmem:[#allocation5 + $0x350] sm:$0xff]
    %v291 = vld [vmem:[#allocation5 + $0x358] sm:$0xff]
    %v292 = vld [vmem:[#allocation5 + $0x360] sm:$0xff]
    %v293 = vld [vmem:[#allocation5 + $0x368] sm:$0xff]
    %v294 = vld [vmem:[#allocation5 + $0x370] sm:$0xff]
    %v295 = vld [vmem:[#allocation5 + $0x378] sm:$0xff]
    %v296 = vld [vmem:[#allocation5 + $0x380] sm:$0xff]
    %v297 = vld [vmem:[#allocation5 + $0x388] sm:$0xff]
    %v298 = vld [vmem:[#allocation5 + $0x390] sm:$0xff]
    %v299 = vld [vmem:[#allocation5 + $0x398] sm:$0xff]
    %v300 = vld [vmem:[#allocation5 + $0x3a0] sm:$0xff]
    %v301 = vld [vmem:[#allocation5 + $0x3a8] sm:$0xff]
    %v302 = vld [vmem:[#allocation5 + $0x3b0] sm:$0xff]
    %v303 = vld [vmem:[#allocation5 + $0x3b8] sm:$0xff]
    %v304 = vld [vmem:[#allocation5 + $0x3c0] sm:$0xff]
    %v305 = vld [vmem:[#allocation5 + $0x3c8] sm:$0xff]
    %v306 = vld [vmem:[#allocation5 + $0x3d0] sm:$0xff]
    %v307 = vld [vmem:[#allocation5 + $0x3d8] sm:$0xff]
    %v308 = vld [vmem:[#allocation5 + $0x3e0] sm:$0xff]
    %v309 = vld [vmem:[#allocation5 + $0x3e8] sm:$0xff]
    %v310 = vld [vmem:[#allocation5 + $0x3f0] sm:$0xff]
    %v311 = vld [vmem:[#allocation5 + $0x3f8] sm:$0xff]
    %v312 = vld [vmem:[#allocation5 + $0x400] sm:$0xff]
    %v313 = vld [vmem:[#allocation5 + $0x408] sm:$0xff]
    %v314 = vld [vmem:[#allocation5 + $0x410] sm:$0xff]
    %v315 = vld [vmem:[#allocation5 + $0x418] sm:$0xff]
    %v316 = vld [vmem:[#allocation5 + $0x420] sm:$0xff]
    %v317 = vld [vmem:[#allocation5 + $0x428] sm:$0xff]
    %v318 = vld [vmem:[#allocation5 + $0x430] sm:$0xff]
    %v319 = vld [vmem:[#allocation5 + $0x438] sm:$0xff]
    %v320 = vld [vmem:[#allocation5 + $0x440] sm:$0xff]
    %v321 = vld [vmem:[#allocation5 + $0x448] sm:$0xff]
    %v322 = vld [vmem:[#allocation5 + $0x450] sm:$0xff]
    %v323 = vld [vmem:[#allocation5 + $0x458] sm:$0xff]
    %v324 = vld [vmem:[#allocation5 + $0x460] sm:$0xff]
    %v325 = vld [vmem:[#allocation5 + $0x468] sm:$0xff]
    %v326 = vld [vmem:[#allocation5 + $0x470] sm:$0xff]
    %v327 = vld [vmem:[#allocation5 + $0x478] sm:$0xff]
    %v328 = vld [vmem:[#allocation5 + $0x480] sm:$0xff]
    %v329 = vld [vmem:[#allocation5 + $0x488] sm:$0xff]
    %v330 = vld [vmem:[#allocation5 + $0x490] sm:$0xff]
    %v331 = vld [vmem:[#allocation5 + $0x498] sm:$0xff]
    %v332 = vld [vmem:[#allocation5 + $0x4a0] sm:$0xff]
    %v333 = vld [vmem:[#allocation5 + $0x4a8] sm:$0xff]
    %v334 = vld [vmem:[#allocation5 + $0x4b0] sm:$0xff]
    %v335 = vld [vmem:[#allocation5 + $0x4b8] sm:$0xff]
    %v336 = vld [vmem:[#allocation5 + $0x4c0] sm:$0xff]
    %v337 = vld [vmem:[#allocation5 + $0x4c8] sm:$0xff]
    %v338 = vld [vmem:[#allocation5 + $0x4d0] sm:$0xff]
    %v339 = vld [vmem:[#allocation5 + $0x4d8] sm:$0xff]
    %v340 = vld [vmem:[#allocation5 + $0x4e0] sm:$0xff]
    %v341 = vld [vmem:[#allocation5 + $0x4e8] sm:$0xff]
    %v342 = vld [vmem:[#allocation5 + $0x4f0] sm:$0xff]
    %v343 = vld [vmem:[#allocation5 + $0x4f8] sm:$0xff]
    %v344 = vld [vmem:[#allocation5 + $0x500] sm:$0xff]
    %v345 = vld [vmem:[#allocation5 + $0x508] sm:$0xff]
    %v346 = vld [vmem:[#allocation5 + $0x510] sm:$0xff]
    %v347 = vld [vmem:[#allocation5 + $0x518] sm:$0xff]
    %v348 = vld [vmem:[#allocation5 + $0x520] sm:$0xff]
    %v349 = vld [vmem:[#allocation5 + $0x528] sm:$0xff]
    %v350 = vld [vmem:[#allocation5 + $0x530] sm:$0xff]
    %v351 = vld [vmem:[#allocation5 + $0x538] sm:$0xff]
    %v352 = vld [vmem:[#allocation5 + $0x540] sm:$0xff]
    %v353 = vld [vmem:[#allocation5 + $0x548] sm:$0xff]
    %v354 = vld [vmem:[#allocation5 + $0x550] sm:$0xff]
    %v355 = vld [vmem:[#allocation5 + $0x558] sm:$0xff]
    %v356 = vld [vmem:[#allocation5 + $0x560] sm:$0xff]
    %v357 = vld [vmem:[#allocation5 + $0x568] sm:$0xff]
    %v358 = vld [vmem:[#allocation5 + $0x570] sm:$0xff]
    %v359 = vld [vmem:[#allocation5 + $0x578] sm:$0xff]
    %v360 = vld [vmem:[#allocation5 + $0x580] sm:$0xff]
    %v361 = vld [vmem:[#allocation5 + $0x588] sm:$0xff]
    %v362 = vld [vmem:[#allocation5 + $0x590] sm:$0xff]
    %v363 = vld [vmem:[#allocation5 + $0x598] sm:$0xff]
    %v364 = vld [vmem:[#allocation5 + $0x5a0] sm:$0xff]
    %v365 = vld [vmem:[#allocation5 + $0x5a8] sm:$0xff]
    %v366 = vld [vmem:[#allocation5 + $0x5b0] sm:$0xff]
    %v367 = vld [vmem:[#allocation5 + $0x5b8] sm:$0xff]
    %v368 = vld [vmem:[#allocation5 + $0x5c0] sm:$0xff]
    %v369 = vld [vmem:[#allocation5 + $0x5c8] sm:$0xff]
    %v370 = vld [vmem:[#allocation5 + $0x5d0] sm:$0xff]
    %v371 = vld [vmem:[#allocation5 + $0x5d8] sm:$0xff]
    %v372 = vld [vmem:[#allocation5 + $0x5e0] sm:$0xff]
    %v373 = vld [vmem:[#allocation5 + $0x5e8] sm:$0xff]
    %v374 = vld [vmem:[#allocation5 + $0x5f0] sm:$0xff]
    %v375 = vld [vmem:[#allocation5 + $0x5f8] sm:$0xff]
    %v376 = vld [vmem:[#allocation5 + $0x600] sm:$0xff]
    %v377 = vld [vmem:[#allocation5 + $0x608] sm:$0xff]
    %v378 = vld [vmem:[#allocation5 + $0x610] sm:$0xff]
    %v379 = vld [vmem:[#allocation5 + $0x618] sm:$0xff]
    %v380 = vld [vmem:[%s2] sm:$0xf]
    %v382 = vlaneseq
    %v383 = vshrl.u32 %v382, 7
    %v384 = vsub.s32 0, %v383
    %v385 = vrot.slane %v380, %v384
    %v386 = vlaneseq
    %v387 = vshrl.u32 %v386, 7
    %v388 = vsub.s32 1, %v387
    %v389 = vrot.slane %v380, %v388
    %v390 = vlaneseq
    %v391 = vshrl.u32 %v390, 7
    %v392 = vsub.s32 2, %v391
    %v393 = vrot.slane %v380, %v392
    %v394 = vlaneseq
    %v395 = vshrl.u32 %v394, 7
    %v396 = vsub.s32 3, %v395
    %v397 = vrot.slane %v380, %v396
    %v598 = vunpack.c.l.b16 %v184
    %v599 = vunpack.c.h.b16 %v184
    %v600 = vunpack.c.l.b16 %v185
    %v601 = vunpack.c.h.b16 %v185
    %v602 = vunpack.c.l.b16 %v186
    %v603 = vunpack.c.h.b16 %v186
    %v604 = vunpack.c.l.b16 %v187
    %v605 = vunpack.c.h.b16 %v187
    %v606 = vunpack.c.l.b16 %v188
    %v607 = vunpack.c.h.b16 %v188
    %v608 = vunpack.c.l.b16 %v189
    %v609 = vunpack.c.h.b16 %v189
    %v610 = vunpack.c.l.b16 %v190
    %v611 = vunpack.c.h.b16 %v190
    %v612 = vunpack.c.l.b16 %v191
    %v613 = vunpack.c.h.b16 %v191
    %v614 = vunpack.c.l.b16 %v192
    %v615 = vunpack.c.h.b16 %v192
    %v616 = vunpack.c.l.b16 %v193
    %v617 = vunpack.c.h.b16 %v193
    %v618 = vunpack.c.l.b16 %v194
    %v619 = vunpack.c.h.b16 %v194
    %v620 = vunpack.c.l.b16 %v195
    %v621 = vunpack.c.h.b16 %v195
    %v622 = vunpack.c.l.b16 %v196
    %v623 = vunpack.c.h.b16 %v196
    %v624 = vunpack.c.l.b16 %v197
    %v625 = vunpack.c.h.b16 %v197
    %v626 = vunpack.c.l.b16 %v198
    %v627 = vunpack.c.h.b16 %v198
    %v628 = vunpack.c.l.b16 %v199
    %v629 = vunpack.c.h.b16 %v199
    %v630 = vunpack.c.l.b16 %v200
    %v631 = vunpack.c.h.b16 %v200
    %v632 = vunpack.c.l.b16 %v201
    %v633 = vunpack.c.h.b16 %v201
    %v634 = vunpack.c.l.b16 %v202
    %v635 = vunpack.c.h.b16 %v202
    %v636 = vunpack.c.l.b16 %v203
    %v637 = vunpack.c.h.b16 %v203
    %v638 = vunpack.c.l.b16 %v204
    %v639 = vunpack.c.h.b16 %v204
    %v640 = vunpack.c.l.b16 %v205
    %v641 = vunpack.c.h.b16 %v205
    %v642 = vunpack.c.l.b16 %v206
    %v643 = vunpack.c.h.b16 %v206
    %v644 = vunpack.c.l.b16 %v207
    %v645 = vunpack.c.h.b16 %v207
    %v646 = vunpack.c.l.b16 %v208
    %v647 = vunpack.c.h.b16 %v208
    %v648 = vunpack.c.l.b16 %v209
    %v649 = vunpack.c.h.b16 %v209
    %v650 = vunpack.c.l.b16 %v210
    %v651 = vunpack.c.h.b16 %v210
    %v652 = vunpack.c.l.b16 %v211
    %v653 = vunpack.c.h.b16 %v211
    %v654 = vunpack.c.l.b16 %v212
    %v655 = vunpack.c.h.b16 %v212
    %v656 = vunpack.c.l.b16 %v213
    %v657 = vunpack.c.h.b16 %v213
    %v658 = vunpack.c.l.b16 %v214
    %v659 = vunpack.c.h.b16 %v214
    %v660 = vunpack.c.l.b16 %v215
    %v661 = vunpack.c.h.b16 %v215
    %v662 = vunpack.c.l.b16 %v216
    %v663 = vunpack.c.h.b16 %v216
    %v664 = vunpack.c.l.b16 %v217
    %v665 = vunpack.c.h.b16 %v217
    %v666 = vunpack.c.l.b16 %v218
    %v667 = vunpack.c.h.b16 %v218
    %v668 = vunpack.c.l.b16 %v219
    %v669 = vunpack.c.h.b16 %v219
    %v670 = vunpack.c.l.b16 %v220
    %v671 = vunpack.c.h.b16 %v220
    %v672 = vunpack.c.l.b16 %v221
    %v673 = vunpack.c.h.b16 %v221
    %v674 = vunpack.c.l.b16 %v222
    %v675 = vunpack.c.h.b16 %v222
    %v676 = vunpack.c.l.b16 %v223
    %v677 = vunpack.c.h.b16 %v223
    %v678 = vunpack.c.l.b16 %v224
    %v679 = vunpack.c.h.b16 %v224
    %v680 = vunpack.c.l.b16 %v225
    %v681 = vunpack.c.h.b16 %v225
    %v682 = vunpack.c.l.b16 %v226
    %v683 = vunpack.c.h.b16 %v226
    %v684 = vunpack.c.l.b16 %v227
    %v685 = vunpack.c.h.b16 %v227
    %v686 = vunpack.c.l.b16 %v228
    %v687 = vunpack.c.h.b16 %v228
    %v688 = vunpack.c.l.b16 %v229
    %v689 = vunpack.c.h.b16 %v229
    %v690 = vunpack.c.l.b16 %v230
    %v691 = vunpack.c.h.b16 %v230
    %v692 = vunpack.c.l.b16 %v231
    %v693 = vunpack.c.h.b16 %v231
    %v694 = vunpack.c.l.b16 %v232
    %v695 = vunpack.c.h.b16 %v232
    %v696 = vunpack.c.l.b16 %v233
    %v697 = vunpack.c.h.b16 %v233
    %v698 = vunpack.c.l.b16 %v234
    %v699 = vunpack.c.h.b16 %v234
    %v700 = vunpack.c.l.b16 %v235
    %v701 = vunpack.c.h.b16 %v235
    %v702 = vunpack.c.l.b16 %v236
    %v703 = vunpack.c.h.b16 %v236
    %v704 = vunpack.c.l.b16 %v237
    %v705 = vunpack.c.h.b16 %v237
    %v706 = vunpack.c.l.b16 %v238
    %v707 = vunpack.c.h.b16 %v238
    %v708 = vunpack.c.l.b16 %v239
    %v709 = vunpack.c.h.b16 %v239
    %v710 = vunpack.c.l.b16 %v240
    %v711 = vunpack.c.h.b16 %v240
    %v712 = vunpack.c.l.b16 %v241
    %v713 = vunpack.c.h.b16 %v241
    %v714 = vunpack.c.l.b16 %v242
    %v715 = vunpack.c.h.b16 %v242
    %v716 = vunpack.c.l.b16 %v243
    %v717 = vunpack.c.h.b16 %v243
    %v718 = vunpack.c.l.b16 %v244
    %v719 = vunpack.c.h.b16 %v244
    %v720 = vunpack.c.l.b16 %v245
    %v721 = vunpack.c.h.b16 %v245
    %v722 = vunpack.c.l.b16 %v246
    %v723 = vunpack.c.h.b16 %v246
    %v724 = vunpack.c.l.b16 %v247
    %v725 = vunpack.c.h.b16 %v247
    %v726 = vunpack.c.l.b16 %v248
    %v727 = vunpack.c.h.b16 %v248
    %v728 = vunpack.c.l.b16 %v249
    %v729 = vunpack.c.h.b16 %v249
    %v730 = vunpack.c.l.b16 %v250
    %v731 = vunpack.c.h.b16 %v250
    %v732 = vunpack.c.l.b16 %v251
    %v733 = vunpack.c.h.b16 %v251
    %v734 = vunpack.c.l.b16 %v252
    %v735 = vunpack.c.h.b16 %v252
    %v736 = vunpack.c.l.b16 %v253
    %v737 = vunpack.c.h.b16 %v253
    %v738 = vunpack.c.l.b16 %v254
    %v739 = vunpack.c.h.b16 %v254
    %v740 = vunpack.c.l.b16 %v255
    %v741 = vunpack.c.h.b16 %v255
    %v742 = vunpack.c.l.b16 %v256
    %v743 = vunpack.c.h.b16 %v256
    %v744 = vunpack.c.l.b16 %v257
    %v745 = vunpack.c.h.b16 %v257
    %v746 = vunpack.c.l.b16 %v258
    %v747 = vunpack.c.h.b16 %v258
    %v748 = vunpack.c.l.b16 %v259
    %v749 = vunpack.c.h.b16 %v259
    %v750 = vunpack.c.l.b16 %v260
    %v751 = vunpack.c.h.b16 %v260
    %v752 = vunpack.c.l.b16 %v261
    %v753 = vunpack.c.h.b16 %v261
    %v754 = vunpack.c.l.b16 %v262
    %v755 = vunpack.c.h.b16 %v262
    %v756 = vunpack.c.l.b16 %v263
    %v757 = vunpack.c.h.b16 %v263
    %v758 = vunpack.c.l.b16 %v264
    %v759 = vunpack.c.h.b16 %v264
    %v760 = vunpack.c.l.b16 %v265
    %v761 = vunpack.c.h.b16 %v265
    %v762 = vunpack.c.l.b16 %v266
    %v763 = vunpack.c.h.b16 %v266
    %v764 = vunpack.c.l.b16 %v267
    %v765 = vunpack.c.h.b16 %v267
    %v766 = vunpack.c.l.b16 %v268
    %v767 = vunpack.c.h.b16 %v268
    %v768 = vunpack.c.l.b16 %v269
    %v769 = vunpack.c.h.b16 %v269
    %v770 = vunpack.c.l.b16 %v270
    %v771 = vunpack.c.h.b16 %v270
    %v772 = vunpack.c.l.b16 %v271
    %v773 = vunpack.c.h.b16 %v271
    %v774 = vunpack.c.l.b16 %v272
    %v775 = vunpack.c.h.b16 %v272
    %v776 = vunpack.c.l.b16 %v273
    %v777 = vunpack.c.h.b16 %v273
    %v778 = vunpack.c.l.b16 %v274
    %v779 = vunpack.c.h.b16 %v274
    %v780 = vunpack.c.l.b16 %v275
    %v781 = vunpack.c.h.b16 %v275
    %v782 = vunpack.c.l.b16 %v276
    %v783 = vunpack.c.h.b16 %v276
    %v784 = vunpack.c.l.b16 %v277
    %v785 = vunpack.c.h.b16 %v277
    %v786 = vunpack.c.l.b16 %v278
    %v787 = vunpack.c.h.b16 %v278
    %v788 = vunpack.c.l.b16 %v279
    %v789 = vunpack.c.h.b16 %v279
    %v790 = vunpack.c.l.b16 %v280
    %v791 = vunpack.c.h.b16 %v280
    %v792 = vunpack.c.l.b16 %v281
    %v793 = vunpack.c.h.b16 %v281
    %v794 = vunpack.c.l.b16 %v282
    %v795 = vunpack.c.h.b16 %v282
    %v796 = vunpack.c.l.b16 %v283
    %v797 = vunpack.c.h.b16 %v283
    %v798 = vunpack.c.l.b16 %v284
    %v799 = vunpack.c.h.b16 %v284
    %v800 = vunpack.c.l.b16 %v285
    %v801 = vunpack.c.h.b16 %v285
    %v802 = vunpack.c.l.b16 %v286
    %v803 = vunpack.c.h.b16 %v286
    %v804 = vunpack.c.l.b16 %v287
    %v805 = vunpack.c.h.b16 %v287
    %v806 = vunpack.c.l.b16 %v288
    %v807 = vunpack.c.h.b16 %v288
    %v808 = vunpack.c.l.b16 %v289
    %v809 = vunpack.c.h.b16 %v289
    %v810 = vunpack.c.l.b16 %v290
    %v811 = vunpack.c.h.b16 %v290
    %v812 = vunpack.c.l.b16 %v291
    %v813 = vunpack.c.h.b16 %v291
    %v814 = vunpack.c.l.b16 %v292
    %v815 = vunpack.c.h.b16 %v292
    %v816 = vunpack.c.l.b16 %v293
    %v817 = vunpack.c.h.b16 %v293
    %v818 = vunpack.c.l.b16 %v294
    %v819 = vunpack.c.h.b16 %v294
    %v820 = vunpack.c.l.b16 %v295
    %v821 = vunpack.c.h.b16 %v295
    %v822 = vunpack.c.l.b16 %v296
    %v823 = vunpack.c.h.b16 %v296
    %v824 = vunpack.c.l.b16 %v297
    %v825 = vunpack.c.h.b16 %v297
    %v826 = vunpack.c.l.b16 %v298
    %v827 = vunpack.c.h.b16 %v298
    %v828 = vunpack.c.l.b16 %v299
    %v829 = vunpack.c.h.b16 %v299
    %v830 = vunpack.c.l.b16 %v300
    %v831 = vunpack.c.h.b16 %v300
    %v832 = vunpack.c.l.b16 %v301
    %v833 = vunpack.c.h.b16 %v301
    %v834 = vunpack.c.l.b16 %v302
    %v835 = vunpack.c.h.b16 %v302
    %v836 = vunpack.c.l.b16 %v303
    %v837 = vunpack.c.h.b16 %v303
    %v838 = vunpack.c.l.b16 %v304
    %v839 = vunpack.c.h.b16 %v304
    %v840 = vunpack.c.l.b16 %v305
    %v841 = vunpack.c.h.b16 %v305
    %v842 = vunpack.c.l.b16 %v306
    %v843 = vunpack.c.h.b16 %v306
    %v844 = vunpack.c.l.b16 %v307
    %v845 = vunpack.c.h.b16 %v307
    %v846 = vunpack.c.l.b16 %v308
    %v847 = vunpack.c.h.b16 %v308
    %v848 = vunpack.c.l.b16 %v309
    %v849 = vunpack.c.h.b16 %v309
    %v850 = vunpack.c.l.b16 %v310
    %v851 = vunpack.c.h.b16 %v310
    %v852 = vunpack.c.l.b16 %v311
    %v853 = vunpack.c.h.b16 %v311
    %v854 = vunpack.c.l.b16 %v312
    %v855 = vunpack.c.h.b16 %v312
    %v856 = vunpack.c.l.b16 %v313
    %v857 = vunpack.c.h.b16 %v313
    %v858 = vunpack.c.l.b16 %v314
    %v859 = vunpack.c.h.b16 %v314
    %v860 = vunpack.c.l.b16 %v315
    %v861 = vunpack.c.h.b16 %v315
    %v862 = vunpack.c.l.b16 %v316
    %v863 = vunpack.c.h.b16 %v316
    %v864 = vunpack.c.l.b16 %v317
    %v865 = vunpack.c.h.b16 %v317
    %v866 = vunpack.c.l.b16 %v318
    %v867 = vunpack.c.h.b16 %v318
    %v868 = vunpack.c.l.b16 %v319
    %v869 = vunpack.c.h.b16 %v319
    %v870 = vunpack.c.l.b16 %v320
    %v871 = vunpack.c.h.b16 %v320
    %v872 = vunpack.c.l.b16 %v321
    %v873 = vunpack.c.h.b16 %v321
    %v874 = vunpack.c.l.b16 %v322
    %v875 = vunpack.c.h.b16 %v322
    %v876 = vunpack.c.l.b16 %v323
    %v877 = vunpack.c.h.b16 %v323
    %v878 = vunpack.c.l.b16 %v324
    %v879 = vunpack.c.h.b16 %v324
    %v880 = vunpack.c.l.b16 %v325
    %v881 = vunpack.c.h.b16 %v325
    %v882 = vunpack.c.l.b16 %v326
    %v883 = vunpack.c.h.b16 %v326
    %v884 = vunpack.c.l.b16 %v327
    %v885 = vunpack.c.h.b16 %v327
    %v886 = vunpack.c.l.b16 %v328
    %v887 = vunpack.c.h.b16 %v328
    %v888 = vunpack.c.l.b16 %v329
    %v889 = vunpack.c.h.b16 %v329
    %v890 = vunpack.c.l.b16 %v330
    %v891 = vunpack.c.h.b16 %v330
    %v892 = vunpack.c.l.b16 %v331
    %v893 = vunpack.c.h.b16 %v331
    %v894 = vunpack.c.l.b16 %v332
    %v895 = vunpack.c.h.b16 %v332
    %v896 = vunpack.c.l.b16 %v333
    %v897 = vunpack.c.h.b16 %v333
    %v898 = vunpack.c.l.b16 %v334
    %v899 = vunpack.c.h.b16 %v334
    %v900 = vunpack.c.l.b16 %v335
    %v901 = vunpack.c.h.b16 %v335
    %v902 = vunpack.c.l.b16 %v336
    %v903 = vunpack.c.h.b16 %v336
    %v904 = vunpack.c.l.b16 %v337
    %v905 = vunpack.c.h.b16 %v337
    %v906 = vunpack.c.l.b16 %v338
    %v907 = vunpack.c.h.b16 %v338
    %v908 = vunpack.c.l.b16 %v339
    %v909 = vunpack.c.h.b16 %v339
    %v910 = vunpack.c.l.b16 %v340
    %v911 = vunpack.c.h.b16 %v340
    %v912 = vunpack.c.l.b16 %v341
    %v913 = vunpack.c.h.b16 %v341
    %v914 = vunpack.c.l.b16 %v342
    %v915 = vunpack.c.h.b16 %v342
    %v916 = vunpack.c.l.b16 %v343
    %v917 = vunpack.c.h.b16 %v343
    %v918 = vunpack.c.l.b16 %v344
    %v919 = vunpack.c.h.b16 %v344
    %v920 = vunpack.c.l.b16 %v345
    %v921 = vunpack.c.h.b16 %v345
    %v922 = vunpack.c.l.b16 %v346
    %v923 = vunpack.c.h.b16 %v346
    %v924 = vunpack.c.l.b16 %v347
    %v925 = vunpack.c.h.b16 %v347
    %v926 = vunpack.c.l.b16 %v348
    %v927 = vunpack.c.h.b16 %v348
    %v928 = vunpack.c.l.b16 %v349
    %v929 = vunpack.c.h.b16 %v349
    %v930 = vunpack.c.l.b16 %v350
    %v931 = vunpack.c.h.b16 %v350
    %v932 = vunpack.c.l.b16 %v351
    %v933 = vunpack.c.h.b16 %v351
    %v934 = vunpack.c.l.b16 %v352
    %v935 = vunpack.c.h.b16 %v352
    %v936 = vunpack.c.l.b16 %v353
    %v937 = vunpack.c.h.b16 %v353
    %v938 = vunpack.c.l.b16 %v354
    %v939 = vunpack.c.h.b16 %v354
    %v940 = vunpack.c.l.b16 %v355
    %v941 = vunpack.c.h.b16 %v355
    %v942 = vunpack.c.l.b16 %v356
    %v943 = vunpack.c.h.b16 %v356
    %v944 = vunpack.c.l.b16 %v357
    %v945 = vunpack.c.h.b16 %v357
    %v946 = vunpack.c.l.b16 %v358
    %v947 = vunpack.c.h.b16 %v358
    %v948 = vunpack.c.l.b16 %v359
    %v949 = vunpack.c.h.b16 %v359
    %v950 = vunpack.c.l.b16 %v360
    %v951 = vunpack.c.h.b16 %v360
    %v952 = vunpack.c.l.b16 %v361
    %v953 = vunpack.c.h.b16 %v361
    %v954 = vunpack.c.l.b16 %v362
    %v955 = vunpack.c.h.b16 %v362
    %v956 = vunpack.c.l.b16 %v363
    %v957 = vunpack.c.h.b16 %v363
    %v958 = vunpack.c.l.b16 %v364
    %v959 = vunpack.c.h.b16 %v364
    %v960 = vunpack.c.l.b16 %v365
    %v961 = vunpack.c.h.b16 %v365
    %v962 = vunpack.c.l.b16 %v366
    %v963 = vunpack.c.h.b16 %v366
    %v964 = vunpack.c.l.b16 %v367
    %v965 = vunpack.c.h.b16 %v367
    %v966 = vunpack.c.l.b16 %v368
    %v967 = vunpack.c.h.b16 %v368
    %v968 = vunpack.c.l.b16 %v369
    %v969 = vunpack.c.h.b16 %v369
    %v970 = vunpack.c.l.b16 %v370
    %v971 = vunpack.c.h.b16 %v370
    %v972 = vunpack.c.l.b16 %v371
    %v973 = vunpack.c.h.b16 %v371
    %v974 = vunpack.c.l.b16 %v372
    %v975 = vunpack.c.h.b16 %v372
    %v976 = vunpack.c.l.b16 %v373
    %v977 = vunpack.c.h.b16 %v373
    %v978 = vunpack.c.l.b16 %v374
    %v979 = vunpack.c.h.b16 %v374
    %v980 = vunpack.c.l.b16 %v375
    %v981 = vunpack.c.h.b16 %v375
    %v982 = vunpack.c.l.b16 %v376
    %v983 = vunpack.c.h.b16 %v376
    %v984 = vunpack.c.l.b16 %v377
    %v985 = vunpack.c.h.b16 %v377
    %v986 = vunpack.c.l.b16 %v378
    %v987 = vunpack.c.h.b16 %v378
    %v988 = vunpack.c.l.b16 %v379
    %v989 = vunpack.c.h.b16 %v379
    %v990 = vpack.c.b16 %v602, %v598
    %v991 = vpack.c.b16 %v603, %v599
    %v992 = vpack.c.b16 %v604, %v600
    %v993 = vpack.c.b16 %v605, %v601
    %v994 = vpack.c.b16 %v610, %v606
    %v995 = vpack.c.b16 %v611, %v607
    %v996 = vpack.c.b16 %v612, %v608
    %v997 = vpack.c.b16 %v613, %v609
    %v998 = vpack.c.b16 %v618, %v614
    %v999 = vpack.c.b16 %v619, %v615
    %v1000 = vpack.c.b16 %v620, %v616
    %v1001 = vpack.c.b16 %v621, %v617
    %v1002 = vpack.c.b16 %v626, %v622
    %v1003 = vpack.c.b16 %v627, %v623
    %v1004 = vpack.c.b16 %v628, %v624
    %v1005 = vpack.c.b16 %v629, %v625
    %v1006 = vpack.c.b16 %v634, %v630
    %v1007 = vpack.c.b16 %v635, %v631
    %v1008 = vpack.c.b16 %v636, %v632
    %v1009 = vpack.c.b16 %v637, %v633
    %v1010 = vpack.c.b16 %v642, %v638
    %v1011 = vpack.c.b16 %v643, %v639
    %v1012 = vpack.c.b16 %v644, %v640
    %v1013 = vpack.c.b16 %v645, %v641
    %v1014 = vpack.c.b16 %v650, %v646
    %v1015 = vpack.c.b16 %v651, %v647
    %v1016 = vpack.c.b16 %v652, %v648
    %v1017 = vpack.c.b16 %v653, %v649
    %v1018 = vpack.c.b16 %v658, %v654
    %v1019 = vpack.c.b16 %v659, %v655
    %v1020 = vpack.c.b16 %v660, %v656
    %v1021 = vpack.c.b16 %v661, %v657
    %v1022 = vpack.c.b16 %v666, %v662
    %v1023 = vpack.c.b16 %v667, %v663
    %v1024 = vpack.c.b16 %v668, %v664
    %v1025 = vpack.c.b16 %v669, %v665
    %v1026 = vpack.c.b16 %v674, %v670
    %v1027 = vpack.c.b16 %v675, %v671
    %v1028 = vpack.c.b16 %v676, %v672
    %v1029 = vpack.c.b16 %v677, %v673
    %v1030 = vpack.c.b16 %v682, %v678
    %v1031 = vpack.c.b16 %v683, %v679
    %v1032 = vpack.c.b16 %v684, %v680
    %v1033 = vpack.c.b16 %v685, %v681
    %v1034 = vpack.c.b16 %v690, %v686
    %v1035 = vpack.c.b16 %v691, %v687
    %v1036 = vpack.c.b16 %v692, %v688
    %v1037 = vpack.c.b16 %v693, %v689
    %v1038 = vpack.c.b16 %v698, %v694
    %v1039 = vpack.c.b16 %v699, %v695
    %v1040 = vpack.c.b16 %v700, %v696
    %v1041 = vpack.c.b16 %v701, %v697
    %v1042 = vpack.c.b16 %v706, %v702
    %v1043 = vpack.c.b16 %v707, %v703
    %v1044 = vpack.c.b16 %v708, %v704
    %v1045 = vpack.c.b16 %v709, %v705
    %v1046 = vpack.c.b16 %v714, %v710
    %v1047 = vpack.c.b16 %v715, %v711
    %v1048 = vpack.c.b16 %v716, %v712
    %v1049 = vpack.c.b16 %v717, %v713
    %v1050 = vpack.c.b16 %v722, %v718
    %v1051 = vpack.c.b16 %v723, %v719
    %v1052 = vpack.c.b16 %v724, %v720
    %v1053 = vpack.c.b16 %v725, %v721
    %v1054 = vpack.c.b16 %v730, %v726
    %v1055 = vpack.c.b16 %v731, %v727
    %v1056 = vpack.c.b16 %v732, %v728
    %v1057 = vpack.c.b16 %v733, %v729
    %v1058 = vpack.c.b16 %v738, %v734
    %v1059 = vpack.c.b16 %v739, %v735
    %v1060 = vpack.c.b16 %v740, %v736
    %v1061 = vpack.c.b16 %v741, %v737
    %v1062 = vpack.c.b16 %v746, %v742
    %v1063 = vpack.c.b16 %v747, %v743
    %v1064 = vpack.c.b16 %v748, %v744
    %v1065 = vpack.c.b16 %v749, %v745
    %v1066 = vpack.c.b16 %v754, %v750
    %v1067 = vpack.c.b16 %v755, %v751
    %v1068 = vpack.c.b16 %v756, %v752
    %v1069 = vpack.c.b16 %v757, %v753
    %v1070 = vpack.c.b16 %v762, %v758
    %v1071 = vpack.c.b16 %v763, %v759
    %v1072 = vpack.c.b16 %v764, %v760
    %v1073 = vpack.c.b16 %v765, %v761
    %v1074 = vpack.c.b16 %v770, %v766
    %v1075 = vpack.c.b16 %v771, %v767
    %v1076 = vpack.c.b16 %v772, %v768
    %v1077 = vpack.c.b16 %v773, %v769
    %v1078 = vpack.c.b16 %v778, %v774
    %v1079 = vpack.c.b16 %v779, %v775
    %v1080 = vpack.c.b16 %v780, %v776
    %v1081 = vpack.c.b16 %v781, %v777
    %v1082 = vpack.c.b16 %v786, %v782
    %v1083 = vpack.c.b16 %v787, %v783
    %v1084 = vpack.c.b16 %v788, %v784
    %v1085 = vpack.c.b16 %v789, %v785
    %v1086 = vpack.c.b16 %v794, %v790
    %v1087 = vpack.c.b16 %v795, %v791
    %v1088 = vpack.c.b16 %v796, %v792
    %v1089 = vpack.c.b16 %v797, %v793
    %v1090 = vpack.c.b16 %v802, %v798
    %v1091 = vpack.c.b16 %v803, %v799
    %v1092 = vpack.c.b16 %v804, %v800
    %v1093 = vpack.c.b16 %v805, %v801
    %v1094 = vpack.c.b16 %v810, %v806
    %v1095 = vpack.c.b16 %v811, %v807
    %v1096 = vpack.c.b16 %v812, %v808
    %v1097 = vpack.c.b16 %v813, %v809
    %v1098 = vpack.c.b16 %v818, %v814
    %v1099 = vpack.c.b16 %v819, %v815
    %v1100 = vpack.c.b16 %v820, %v816
    %v1101 = vpack.c.b16 %v821, %v817
    %v1102 = vpack.c.b16 %v826, %v822
    %v1103 = vpack.c.b16 %v827, %v823
    %v1104 = vpack.c.b16 %v828, %v824
    %v1105 = vpack.c.b16 %v829, %v825
    %v1106 = vpack.c.b16 %v834, %v830
    %v1107 = vpack.c.b16 %v835, %v831
    %v1108 = vpack.c.b16 %v836, %v832
    %v1109 = vpack.c.b16 %v837, %v833
    %v1110 = vpack.c.b16 %v842, %v838
    %v1111 = vpack.c.b16 %v843, %v839
    %v1112 = vpack.c.b16 %v844, %v840
    %v1113 = vpack.c.b16 %v845, %v841
    %v1114 = vpack.c.b16 %v850, %v846
    %v1115 = vpack.c.b16 %v851, %v847
    %v1116 = vpack.c.b16 %v852, %v848
    %v1117 = vpack.c.b16 %v853, %v849
    %v1118 = vpack.c.b16 %v858, %v854
    %v1119 = vpack.c.b16 %v859, %v855
    %v1120 = vpack.c.b16 %v860, %v856
    %v1121 = vpack.c.b16 %v861, %v857
    %v1122 = vpack.c.b16 %v866, %v862
    %v1123 = vpack.c.b16 %v867, %v863
    %v1124 = vpack.c.b16 %v868, %v864
    %v1125 = vpack.c.b16 %v869, %v865
    %v1126 = vpack.c.b16 %v874, %v870
    %v1127 = vpack.c.b16 %v875, %v871
    %v1128 = vpack.c.b16 %v876, %v872
    %v1129 = vpack.c.b16 %v877, %v873
    %v1130 = vpack.c.b16 %v882, %v878
    %v1131 = vpack.c.b16 %v883, %v879
    %v1132 = vpack.c.b16 %v884, %v880
    %v1133 = vpack.c.b16 %v885, %v881
    %v1134 = vpack.c.b16 %v890, %v886
    %v1135 = vpack.c.b16 %v891, %v887
    %v1136 = vpack.c.b16 %v892, %v888
    %v1137 = vpack.c.b16 %v893, %v889
    %v1138 = vpack.c.b16 %v898, %v894
    %v1139 = vpack.c.b16 %v899, %v895
    %v1140 = vpack.c.b16 %v900, %v896
    %v1141 = vpack.c.b16 %v901, %v897
    %v1142 = vpack.c.b16 %v906, %v902
    %v1143 = vpack.c.b16 %v907, %v903
    %v1144 = vpack.c.b16 %v908, %v904
    %v1145 = vpack.c.b16 %v909, %v905
    %v1146 = vpack.c.b16 %v914, %v910
    %v1147 = vpack.c.b16 %v915, %v911
    %v1148 = vpack.c.b16 %v916, %v912
    %v1149 = vpack.c.b16 %v917, %v913
    %v1150 = vpack.c.b16 %v922, %v918
    %v1151 = vpack.c.b16 %v923, %v919
    %v1152 = vpack.c.b16 %v924, %v920
    %v1153 = vpack.c.b16 %v925, %v921
    %v1154 = vpack.c.b16 %v930, %v926
    %v1155 = vpack.c.b16 %v931, %v927
    %v1156 = vpack.c.b16 %v932, %v928
    %v1157 = vpack.c.b16 %v933, %v929
    %v1158 = vpack.c.b16 %v938, %v934
    %v1159 = vpack.c.b16 %v939, %v935
    %v1160 = vpack.c.b16 %v940, %v936
    %v1161 = vpack.c.b16 %v941, %v937
    %v1162 = vpack.c.b16 %v946, %v942
    %v1163 = vpack.c.b16 %v947, %v943
    %v1164 = vpack.c.b16 %v948, %v944
    %v1165 = vpack.c.b16 %v949, %v945
    %v1166 = vpack.c.b16 %v954, %v950
    %v1167 = vpack.c.b16 %v955, %v951
    %v1168 = vpack.c.b16 %v956, %v952
    %v1169 = vpack.c.b16 %v957, %v953
    %v1170 = vpack.c.b16 %v962, %v958
    %v1171 = vpack.c.b16 %v963, %v959
    %v1172 = vpack.c.b16 %v964, %v960
    %v1173 = vpack.c.b16 %v965, %v961
    %v1174 = vpack.c.b16 %v970, %v966
    %v1175 = vpack.c.b16 %v971, %v967
    %v1176 = vpack.c.b16 %v972, %v968
    %v1177 = vpack.c.b16 %v973, %v969
    %v1178 = vpack.c.b16 %v978, %v974
    %v1179 = vpack.c.b16 %v979, %v975
    %v1180 = vpack.c.b16 %v980, %v976
    %v1181 = vpack.c.b16 %v981, %v977
    %v1182 = vpack.c.b16 %v986, %v982
    %v1183 = vpack.c.b16 %v987, %v983
    %v1184 = vpack.c.b16 %v988, %v984
    %v1185 = vpack.c.b16 %v989, %v985
    %vm1382 = vcmask 130048
    %v1384 = vsel %vm1382, %v183, 0
    %1386 = vmatprep.subr.bf16.mxu0 %v991
    %1387 = vmatpush1.bf16.msra.mxu0 %v990
    %1388 = vmatprep.subr.bf16.mxu0 %v995
    %1389 = vmatpush1.bf16.msra.mxu0 %v994
    %1390 = vmatprep.subr.bf16.mxu0 %v999
    %1391 = vmatpush1.bf16.msra.mxu0 %v998
    %1392 = vmatprep.subr.bf16.mxu0 %v1003
    %1393 = vmatpush1.bf16.msra.mxu0 %v1002
    %1394 = vmatprep.subr.bf16.mxu0 %v1007
    %1395 = vmatpush1.bf16.msra.mxu0 %v1006
    %1396 = vmatprep.subr.bf16.mxu0 %v1011
    %1397 = vmatpush1.bf16.msra.mxu0 %v1010
    %1398 = vmatprep.subr.bf16.mxu0 %v1015
    %1399 = vmatpush1.bf16.msra.mxu0 %v1014
    %1400 = vmatprep.subr.bf16.mxu0 %v1019
    %1401 = vmatpush1.bf16.msra.mxu0 %v1018
    %1402 = vmatprep.subr.bf16.mxu0 %v1023
    %1403 = vmatpush1.bf16.msra.mxu0 %v1022
    %1404 = vmatprep.subr.bf16.mxu0 %v1027
    %1405 = vmatpush1.bf16.msra.mxu0 %v1026
    %1406 = vmatprep.subr.bf16.mxu0 %v1031
    %1407 = vmatpush1.bf16.msra.mxu0 %v1030
    %1408 = vmatprep.subr.bf16.mxu0 %v1035
    %1409 = vmatpush1.bf16.msra.mxu0 %v1034
    %1410 = vmatprep.subr.bf16.mxu0 %v1039
    %1411 = vmatpush1.bf16.msra.mxu0 %v1038
    %1412 = vmatprep.subr.bf16.mxu0 %v1043
    %1413 = vmatpush1.bf16.msra.mxu0 %v1042
    %1414 = vmatprep.subr.bf16.mxu0 %v1047
    %1415 = vmatpush1.bf16.msra.mxu0 %v1046
    %1416 = vmatprep.subr.bf16.mxu0 %v1051
    %1417 = vmatpush1.bf16.msra.mxu0 %v1050
    %1418 = vmatprep.mubr.bf16.mxu0 %v178
    %1419 = vmatmul.mubr.bf16.gmra.mrb[0].mxu0 %v177
    %v1420 = vpop.f32.mrb[0].mxu0
    %v1421 = vadd.f32 %v385, %v1420
    %v1422 = vpop.f32.mrb[0].mxu0
    %v1423 = vadd.f32 %v389, %v1422
    %v1424 = vpop.f32.mrb[0].mxu0
    %v1425 = vpop.f32.mrb[0].mxu0
    %1426 = vdwg.mxu0
    %1427 = vmatprep.subr.bf16.mxu0 %v1055
    %1428 = vmatpush1.bf16.msra.mxu0 %v1054
    %1429 = vmatprep.subr.bf16.mxu0 %v1059
    %1430 = vmatpush1.bf16.msra.mxu0 %v1058
    %1431 = vmatprep.subr.bf16.mxu0 %v1063
    %1432 = vmatpush1.bf16.msra.mxu0 %v1062
    %1433 = vmatprep.subr.bf16.mxu0 %v1067
    %1434 = vmatpush1.bf16.msra.mxu0 %v1066
    %1435 = vmatprep.subr.bf16.mxu0 %v1071
    %1436 = vmatpush1.bf16.msra.mxu0 %v1070
    %1437 = vmatprep.subr.bf16.mxu0 %v1075
    %1438 = vmatpush1.bf16.msra.mxu0 %v1074
    %1439 = vmatprep.subr.bf16.mxu0 %v1079
    %1440 = vmatpush1.bf16.msra.mxu0 %v1078
    %1441 = vmatprep.subr.bf16.mxu0 %v1083
    %1442 = vmatpush1.bf16.msra.mxu0 %v1082
    %1443 = vmatprep.subr.bf16.mxu0 %v1087
    %1444 = vmatpush1.bf16.msra.mxu0 %v1086
    %1445 = vmatprep.subr.bf16.mxu0 %v1091
    %1446 = vmatpush1.bf16.msra.mxu0 %v1090
    %1447 = vmatprep.subr.bf16.mxu0 %v1095
    %1448 = vmatpush1.bf16.msra.mxu0 %v1094
    %1449 = vmatprep.subr.bf16.mxu0 %v1099
    %1450 = vmatpush1.bf16.msra.mxu0 %v1098
    %1451 = vmatprep.subr.bf16.mxu0 %v1103
    %1452 = vmatpush1.bf16.msra.mxu0 %v1102
    %1453 = vmatprep.subr.bf16.mxu0 %v1107
    %1454 = vmatpush1.bf16.msra.mxu0 %v1106
    %1455 = vmatprep.subr.bf16.mxu0 %v1111
    %1456 = vmatpush1.bf16.msra.mxu0 %v1110
    %1457 = vmatprep.subr.bf16.mxu0 %v1115
    %1458 = vmatpush1.bf16.msra.mxu0 %v1114
    %1459 = vmatprep.mubr.bf16.mxu0 %v180
    %1460 = vmatmul.mubr.bf16.gmra.mrb[0].mxu0 %v179
    %v1461 = vpop.f32.mrb[0].mxu0
    %v1462 = vadd.f32 %v1421, %v1461
    %v1463 = vpop.f32.mrb[0].mxu0
    %v1464 = vadd.f32 %v1423, %v1463
    %v1465 = vpop.f32.mrb[0].mxu0
    %v1466 = vpop.f32.mrb[0].mxu0
    %1467 = vdwg.mxu0
    %1468 = vmatprep.subr.bf16.mxu0 %v1119
    %1469 = vmatpush1.bf16.msra.mxu0 %v1118
    %1470 = vmatprep.subr.bf16.mxu0 %v1123
    %1471 = vmatpush1.bf16.msra.mxu0 %v1122
    %1472 = vmatprep.subr.bf16.mxu0 %v1127
    %1473 = vmatpush1.bf16.msra.mxu0 %v1126
    %1474 = vmatprep.subr.bf16.mxu0 %v1131
    %1475 = vmatpush1.bf16.msra.mxu0 %v1130
    %1476 = vmatprep.subr.bf16.mxu0 %v1135
    %1477 = vmatpush1.bf16.msra.mxu0 %v1134
    %1478 = vmatprep.subr.bf16.mxu0 %v1139
    %1479 = vmatpush1.bf16.msra.mxu0 %v1138
    %1480 = vmatprep.subr.bf16.mxu0 %v1143
    %1481 = vmatpush1.bf16.msra.mxu0 %v1142
    %1482 = vmatprep.subr.bf16.mxu0 %v1147
    %1483 = vmatpush1.bf16.msra.mxu0 %v1146
    %1484 = vmatprep.subr.bf16.mxu0 %v1151
    %1485 = vmatpush1.bf16.msra.mxu0 %v1150
    %1486 = vmatprep.subr.bf16.mxu0 %v1155
    %1487 = vmatpush1.bf16.msra.mxu0 %v1154
    %1488 = vmatprep.subr.bf16.mxu0 %v1159
    %1489 = vmatpush1.bf16.msra.mxu0 %v1158
    %1490 = vmatprep.subr.bf16.mxu0 %v1163
    %1491 = vmatpush1.bf16.msra.mxu0 %v1162
    %1492 = vmatprep.subr.bf16.mxu0 %v1167
    %1493 = vmatpush1.bf16.msra.mxu0 %v1166
    %1494 = vmatprep.subr.bf16.mxu0 %v1171
    %1495 = vmatpush1.bf16.msra.mxu0 %v1170
    %1496 = vmatprep.subr.bf16.mxu0 %v1175
    %1497 = vmatpush1.bf16.msra.mxu0 %v1174
    %1498 = vmatprep.subr.bf16.mxu0 %v1179
    %1499 = vmatpush1.bf16.msra.mxu0 %v1178
    %1500 = vmatprep.mubr.bf16.mxu0 %v182
    %1501 = vmatmul.mubr.bf16.gmra.mrb[0].mxu0 %v181
    %v1502 = vpop.f32.mrb[0].mxu0
    %v1503 = vadd.f32 %v1462, %v1502
    %v1504 = vpop.f32.mrb[0].mxu0
    %v1505 = vadd.f32 %v1464, %v1504
    %v1506 = vpop.f32.mrb[0].mxu0
    %v1507 = vpop.f32.mrb[0].mxu0
    %1508 = vdwg.mxu0
    %1509 = vmatprep.subr.bf16.mxu0 %v1183
    %1510 = vmatpush1.bf16.msra.mxu0 %v1182
    %1511 = vmatprep.subr.bf16.mxu0 0
    %1512 = vmatpush1.bf16.msra.mxu0 0
    %1513 = vmatprep.subr.bf16.mxu0 0
    %1514 = vmatpush1.bf16.msra.mxu0 0
    %1515 = vmatprep.subr.bf16.mxu0 0
    %1516 = vmatpush1.bf16.msra.mxu0 0
    %1517 = vmatprep.subr.bf16.mxu0 0
    %1518 = vmatpush1.bf16.msra.mxu0 0
    %1519 = vmatprep.subr.bf16.mxu0 0
    %1520 = vmatpush1.bf16.msra.mxu0 0
    %1521 = vmatprep.subr.bf16.mxu0 0
    %1522 = vmatpush1.bf16.msra.mxu0 0
    %1523 = vmatprep.subr.bf16.mxu0 0
    %1524 = vmatpush1.bf16.msra.mxu0 0
    %1525 = vmatprep.subr.bf16.mxu0 0
    %1526 = vmatpush1.bf16.msra.mxu0 0
    %1527 = vmatprep.subr.bf16.mxu0 0
    %1528 = vmatpush1.bf16.msra.mxu0 0
    %1529 = vmatprep.subr.bf16.mxu0 0
    %1530 = vmatpush1.bf16.msra.mxu0 0
    %1531 = vmatprep.subr.bf16.mxu0 0
    %1532 = vmatpush1.bf16.msra.mxu0 0
    %1533 = vmatprep.subr.bf16.mxu0 0
    %1534 = vmatpush1.bf16.msra.mxu0 0
    %1535 = vmatprep.subr.bf16.mxu0 0
    %1536 = vmatpush1.bf16.msra.mxu0 0
    %1537 = vmatprep.subr.bf16.mxu0 0
    %1538 = vmatpush1.bf16.msra.mxu0 0
    %1539 = vmatprep.subr.bf16.mxu0 0
    %1540 = vmatpush1.bf16.msra.mxu0 0
    %1541 = vmatprep.mubr.bf16.mxu0 0
    %1542 = vmatmul.mubr.bf16.gmra.mrb[0].mxu0 %v1384
    %v1543 = vpop.f32.mrb[0].mxu0
    %v1544 = vadd.f32 %v1503, %v1543
    %v1545 = vpop.f32.mrb[0].mxu0
    %v1546 = vadd.f32 %v1505, %v1545
    %v1547 = vpop.f32.mrb[0].mxu0
    %v1548 = vpop.f32.mrb[0].mxu0
    %1549 = vdwg.mxu0
    %1550 = vmatprep.subr.bf16.mxu0 %v993
    %1551 = vmatpush1.bf16.msra.mxu0 %v992
    %1552 = vmatprep.subr.bf16.mxu0 %v997
    %1553 = vmatpush1.bf16.msra.mxu0 %v996
    %1554 = vmatprep.subr.bf16.mxu0 %v1001
    %1555 = vmatpush1.bf16.msra.mxu0 %v1000
    %1556 = vmatprep.subr.bf16.mxu0 %v1005
    %1557 = vmatpush1.bf16.msra.mxu0 %v1004
    %1558 = vmatprep.subr.bf16.mxu0 %v1009
    %1559 = vmatpush1.bf16.msra.mxu0 %v1008
    %1560 = vmatprep.subr.bf16.mxu0 %v1013
    %1561 = vmatpush1.bf16.msra.mxu0 %v1012
    %1562 = vmatprep.subr.bf16.mxu0 %v1017
    %1563 = vmatpush1.bf16.msra.mxu0 %v1016
    %1564 = vmatprep.subr.bf16.mxu0 %v1021
    %1565 = vmatpush1.bf16.msra.mxu0 %v1020
    %1566 = vmatprep.subr.bf16.mxu0 %v1025
    %1567 = vmatpush1.bf16.msra.mxu0 %v1024
    %1568 = vmatprep.subr.bf16.mxu0 %v1029
    %1569 = vmatpush1.bf16.msra.mxu0 %v1028
    %1570 = vmatprep.subr.bf16.mxu0 %v1033
    %1571 = vmatpush1.bf16.msra.mxu0 %v1032
    %1572 = vmatprep.subr.bf16.mxu0 %v1037
    %1573 = vmatpush1.bf16.msra.mxu0 %v1036
    %1574 = vmatprep.subr.bf16.mxu0 %v1041
    %1575 = vmatpush1.bf16.msra.mxu0 %v1040
    %1576 = vmatprep.subr.bf16.mxu0 %v1045
    %1577 = vmatpush1.bf16.msra.mxu0 %v1044
    %1578 = vmatprep.subr.bf16.mxu0 %v1049
    %1579 = vmatpush1.bf16.msra.mxu0 %v1048
    %1580 = vmatprep.subr.bf16.mxu0 %v1053
    %1581 = vmatpush1.bf16.msra.mxu0 %v1052
    %1582 = vmatprep.mubr.bf16.mxu0 %v178
    %1583 = vmatmul.mubr.bf16.gmra.mrb[0].mxu0 %v177
    %v1584 = vpop.f32.mrb[0].mxu0
    %v1585 = vadd.f32 %v393, %v1584
    %v1586 = vpop.f32.mrb[0].mxu0
    %v1587 = vadd.f32 %v397, %v1586
    %v1588 = vpop.f32.mrb[0].mxu0
    %v1589 = vpop.f32.mrb[0].mxu0
    %1590 = vdwg.mxu0
    %1591 = vmatprep.subr.bf16.mxu0 %v1057
    %1592 = vmatpush1.bf16.msra.mxu0 %v1056
    %1593 = vmatprep.subr.bf16.mxu0 %v1061
    %1594 = vmatpush1.bf16.msra.mxu0 %v1060
    %1595 = vmatprep.subr.bf16.mxu0 %v1065
    %1596 = vmatpush1.bf16.msra.mxu0 %v1064
    %1597 = vmatprep.subr.bf16.mxu0 %v1069
    %1598 = vmatpush1.bf16.msra.mxu0 %v1068
    %1599 = vmatprep.subr.bf16.mxu0 %v1073
    %1600 = vmatpush1.bf16.msra.mxu0 %v1072
    %1601 = vmatprep.subr.bf16.mxu0 %v1077
    %1602 = vmatpush1.bf16.msra.mxu0 %v1076
    %1603 = vmatprep.subr.bf16.mxu0 %v1081
    %1604 = vmatpush1.bf16.msra.mxu0 %v1080
    %1605 = vmatprep.subr.bf16.mxu0 %v1085
    %1606 = vmatpush1.bf16.msra.mxu0 %v1084
    %1607 = vmatprep.subr.bf16.mxu0 %v1089
    %1608 = vmatpush1.bf16.msra.mxu0 %v1088
    %1609 = vmatprep.subr.bf16.mxu0 %v1093
    %1610 = vmatpush1.bf16.msra.mxu0 %v1092
    %1611 = vmatprep.subr.bf16.mxu0 %v1097
    %1612 = vmatpush1.bf16.msra.mxu0 %v1096
    %1613 = vmatprep.subr.bf16.mxu0 %v1101
    %1614 = vmatpush1.bf16.msra.mxu0 %v1100
    %1615 = vmatprep.subr.bf16.mxu0 %v1105
    %1616 = vmatpush1.bf16.msra.mxu0 %v1104
    %1617 = vmatprep.subr.bf16.mxu0 %v1109
    %1618 = vmatpush1.bf16.msra.mxu0 %v1108
    %1619 = vmatprep.subr.bf16.mxu0 %v1113
    %1620 = vmatpush1.bf16.msra.mxu0 %v1112
    %1621 = vmatprep.subr.bf16.mxu0 %v1117
    %1622 = vmatpush1.bf16.msra.mxu0 %v1116
    %1623 = vmatprep.mubr.bf16.mxu0 %v180
    %1624 = vmatmul.mubr.bf16.gmra.mrb[0].mxu0 %v179
    %v1625 = vpop.f32.mrb[0].mxu0
    %v1626 = vadd.f32 %v1585, %v1625
    %v1627 = vpop.f32.mrb[0].mxu0
    %v1628 = vadd.f32 %v1587, %v1627
    %v1629 = vpop.f32.mrb[0].mxu0
    %v1630 = vpop.f32.mrb[0].mxu0
    %1631 = vdwg.mxu0
    %1632 = vmatprep.subr.bf16.mxu0 %v1121
    %1633 = vmatpush1.bf16.msra.mxu0 %v1120
    %1634 = vmatprep.subr.bf16.mxu0 %v1125
    %1635 = vmatpush1.bf16.msra.mxu0 %v1124
    %1636 = vmatprep.subr.bf16.mxu0 %v1129
    %1637 = vmatpush1.bf16.msra.mxu0 %v1128
    %1638 = vmatprep.subr.bf16.mxu0 %v1133
    %1639 = vmatpush1.bf16.msra.mxu0 %v1132
    %1640 = vmatprep.subr.bf16.mxu0 %v1137
    %1641 = vmatpush1.bf16.msra.mxu0 %v1136
    %1642 = vmatprep.subr.bf16.mxu0 %v1141
    %1643 = vmatpush1.bf16.msra.mxu0 %v1140
    %1644 = vmatprep.subr.bf16.mxu0 %v1145
    %1645 = vmatpush1.bf16.msra.mxu0 %v1144
    %1646 = vmatprep.subr.bf16.mxu0 %v1149
    %1647 = vmatpush1.bf16.msra.mxu0 %v1148
    %1648 = vmatprep.subr.bf16.mxu0 %v1153
    %1649 = vmatpush1.bf16.msra.mxu0 %v1152
    %1650 = vmatprep.subr.bf16.mxu0 %v1157
    %1651 = vmatpush1.bf16.msra.mxu0 %v1156
    %1652 = vmatprep.subr.bf16.mxu0 %v1161
    %1653 = vmatpush1.bf16.msra.mxu0 %v1160
    %1654 = vmatprep.subr.bf16.mxu0 %v1165
    %1655 = vmatpush1.bf16.msra.mxu0 %v1164
    %1656 = vmatprep.subr.bf16.mxu0 %v1169
    %1657 = vmatpush1.bf16.msra.mxu0 %v1168
    %1658 = vmatprep.subr.bf16.mxu0 %v1173
    %1659 = vmatpush1.bf16.msra.mxu0 %v1172
    %1660 = vmatprep.subr.bf16.mxu0 %v1177
    %1661 = vmatpush1.bf16.msra.mxu0 %v1176
    %1662 = vmatprep.subr.bf16.mxu0 %v1181
    %1663 = vmatpush1.bf16.msra.mxu0 %v1180
    %1664 = vmatprep.mubr.bf16.mxu0 %v182
    %1665 = vmatmul.mubr.bf16.gmra.mrb[0].mxu0 %v181
    %v1666 = vpop.f32.mrb[0].mxu0
    %v1667 = vadd.f32 %v1626, %v1666
    %v1668 = vpop.f32.mrb[0].mxu0
    %v1669 = vadd.f32 %v1628, %v1668
    %v1670 = vpop.f32.mrb[0].mxu0
    %v1671 = vpop.f32.mrb[0].mxu0
    %1672 = vdwg.mxu0
    %1673 = vmatprep.subr.bf16.mxu0 %v1185
    %1674 = vmatpush1.bf16.msra.mxu0 %v1184
    %1675 = vmatprep.subr.bf16.mxu0 0
    %1676 = vmatpush1.bf16.msra.mxu0 0
    %1677 = vmatprep.subr.bf16.mxu0 0
    %1678 = vmatpush1.bf16.msra.mxu0 0
    %1679 = vmatprep.subr.bf16.mxu0 0
    %1680 = vmatpush1.bf16.msra.mxu0 0
    %1681 = vmatprep.subr.bf16.mxu0 0
    %1682 = vmatpush1.bf16.msra.mxu0 0
    %1683 = vmatprep.subr.bf16.mxu0 0
    %1684 = vmatpush1.bf16.msra.mxu0 0
    %1685 = vmatprep.subr.bf16.mxu0 0
    %1686 = vmatpush1.bf16.msra.mxu0 0
    %1687 = vmatprep.subr.bf16.mxu0 0
    %1688 = vmatpush1.bf16.msra.mxu0 0
    %1689 = vmatprep.subr.bf16.mxu0 0
    %1690 = vmatpush1.bf16.msra.mxu0 0
    %1691 = vmatprep.subr.bf16.mxu0 0
    %1692 = vmatpush1.bf16.msra.mxu0 0
    %1693 = vmatprep.subr.bf16.mxu0 0
    %1694 = vmatpush1.bf16.msra.mxu0 0
    %1695 = vmatprep.subr.bf16.mxu0 0
    %1696 = vmatpush1.bf16.msra.mxu0 0
    %1697 = vmatprep.subr.bf16.mxu0 0
    %1698 = vmatpush1.bf16.msra.mxu0 0
    %1699 = vmatprep.subr.bf16.mxu0 0
    %1700 = vmatpush1.bf16.msra.mxu0 0
    %1701 = vmatprep.subr.bf16.mxu0 0
    %1702 = vmatpush1.bf16.msra.mxu0 0
    %1703 = vmatprep.subr.bf16.mxu0 0
    %1704 = vmatpush1.bf16.msra.mxu0 0
    %1705 = vmatprep.mubr.bf16.mxu0 0
    %1706 = vmatmul.mubr.bf16.gmra.mrb[0].mxu0 %v1384
    %v1707 = vpop.f32.mrb[0].mxu0
    %v1708 = vadd.f32 %v1667, %v1707
    %v1709 = vpop.f32.mrb[0].mxu0
    %v1710 = vadd.f32 %v1669, %v1709
    %v1711 = vpop.f32.mrb[0].mxu0
    %v1712 = vpop.f32.mrb[0].mxu0
    %1713 = vdwg.mxu0
    %v1714 = vmul.f32 %v1544, 0.2
    %v1715 = vmul.f32 %v1546, 0.2
    %v1716 = vmul.f32 %v1708, 0.2
    %v1717 = vmul.f32 %v1710, 0.2
    %v1718 = vmax.f32 %v1544, %v1714
    %v1719 = vmax.f32 %v1546, %v1715
    %v1720 = vmax.f32 %v1708, %v1716
    %v1721 = vmax.f32 %v1710, %v1717
    %v1722 = vpack.c.bf16 %v1718, %v1718
    %v1723 = vpack.c.bf16 %v1719, %v1719
    %v1724 = vpack.c.bf16 %v1720, %v1720
    %v1725 = vpack.c.bf16 %v1721, %v1721
    %v1726 = vld [vmem:[#allocation7] sm:$0xff]
    %v1727 = vld [vmem:[#allocation7 + $0x8] sm:$0xff]
    %v1728 = vld [vmem:[#allocation7 + $0x10] sm:$0xff]
    %v1729 = vld [vmem:[#allocation7 + $0x18] sm:$0xff]
    %v1730 = vld [vmem:[#allocation7 + $0x20] sm:$0xff]
    %v1731 = vld [vmem:[#allocation7 + $0x28] sm:$0xff]
    %v1732 = vld [vmem:[#allocation7 + $0x30] sm:$0xff]
    %v1733 = vld [vmem:[#allocation7 + $0x38] sm:$0xff]
    %v1734 = vld [vmem:[#allocation7 + $0x40] sm:$0xff]
    %v1735 = vld [vmem:[#allocation7 + $0x48] sm:$0xff]
    %v1736 = vld [vmem:[#allocation7 + $0x50] sm:$0xff]
    %v1737 = vld [vmem:[#allocation7 + $0x58] sm:$0xff]
    %v1738 = vld [vmem:[#allocation7 + $0x60] sm:$0xff]
    %v1739 = vld [vmem:[#allocation7 + $0x68] sm:$0xff]
    %v1740 = vld [vmem:[#allocation7 + $0x70] sm:$0xff]
    %v1741 = vld [vmem:[#allocation7 + $0x78] sm:$0xff]
    %v1742 = vld [vmem:[#allocation7 + $0x80] sm:$0xff]
    %v1743 = vld [vmem:[#allocation7 + $0x88] sm:$0xff]
    %v1744 = vld [vmem:[#allocation7 + $0x90] sm:$0xff]
    %v1745 = vld [vmem:[#allocation7 + $0x98] sm:$0xff]
    %v1746 = vld [vmem:[#allocation7 + $0xa0] sm:$0xff]
    %v1747 = vld [vmem:[#allocation7 + $0xa8] sm:$0xff]
    %v1748 = vld [vmem:[#allocation7 + $0xb0] sm:$0xff]
    %v1749 = vld [vmem:[#allocation7 + $0xb8] sm:$0xff]
    %v1750 = vld [vmem:[#allocation7 + $0xc0] sm:$0xff]
    %v1751 = vld [vmem:[#allocation7 + $0xc8] sm:$0xff]
    %v1752 = vld [vmem:[#allocation7 + $0xd0] sm:$0xff]
    %v1753 = vld [vmem:[#allocation7 + $0xd8] sm:$0xff]
    %v1754 = vld [vmem:[#allocation7 + $0xe0] sm:$0xff]
    %v1755 = vld [vmem:[#allocation7 + $0xe8] sm:$0xff]
    %v1756 = vld [vmem:[#allocation7 + $0xf0] sm:$0xff]
    %v1757 = vld [vmem:[#allocation7 + $0xf8] sm:$0xff]
    %v1758 = vld [vmem:[#allocation7 + $0x100] sm:$0xff]
    %v1759 = vld [vmem:[#allocation7 + $0x108] sm:$0xff]
    %v1760 = vld [vmem:[#allocation7 + $0x110] sm:$0xff]
    %v1761 = vld [vmem:[#allocation7 + $0x118] sm:$0xff]
    %v1762 = vld [vmem:[#allocation7 + $0x120] sm:$0xff]
    %v1763 = vld [vmem:[#allocation7 + $0x128] sm:$0xff]
    %v1764 = vld [vmem:[#allocation7 + $0x130] sm:$0xff]
    %v1765 = vld [vmem:[#allocation7 + $0x138] sm:$0xff]
    %v1766 = vld [vmem:[#allocation7 + $0x140] sm:$0xff]
    %v1767 = vld [vmem:[#allocation7 + $0x148] sm:$0xff]
    %v1768 = vld [vmem:[#allocation7 + $0x150] sm:$0xff]
    %v1769 = vld [vmem:[#allocation7 + $0x158] sm:$0xff]
    %v1770 = vld [vmem:[#allocation7 + $0x160] sm:$0xff]
    %v1771 = vld [vmem:[#allocation7 + $0x168] sm:$0xff]
    %v1772 = vld [vmem:[#allocation7 + $0x170] sm:$0xff]
    %v1773 = vld [vmem:[#allocation7 + $0x178] sm:$0xff]
    %v1774 = vld [vmem:[#allocation7 + $0x180] sm:$0xff]
    %v1775 = vld [vmem:[#allocation7 + $0x188] sm:$0xff]
    %v1776 = vld [vmem:[#allocation7 + $0x190] sm:$0xff]
    %v1777 = vld [vmem:[#allocation7 + $0x198] sm:$0xff]
    %v1778 = vld [vmem:[#allocation7 + $0x1a0] sm:$0xff]
    %v1779 = vld [vmem:[#allocation7 + $0x1a8] sm:$0xff]
    %v1780 = vld [vmem:[#allocation7 + $0x1b0] sm:$0xff]
    %v1781 = vld [vmem:[#allocation7 + $0x1b8] sm:$0xff]
    %v1782 = vld [vmem:[#allocation7 + $0x1c0] sm:$0xff]
    %v1783 = vld [vmem:[#allocation7 + $0x1c8] sm:$0xff]
    %v1784 = vld [vmem:[#allocation7 + $0x1d0] sm:$0xff]
    %v1785 = vld [vmem:[#allocation7 + $0x1d8] sm:$0xff]
    %v1786 = vld [vmem:[#allocation7 + $0x1e0] sm:$0xff]
    %v1787 = vld [vmem:[#allocation7 + $0x1e8] sm:$0xff]
    %v1788 = vld [vmem:[#allocation7 + $0x1f0] sm:$0xff]
    %v1789 = vld [vmem:[#allocation7 + $0x1f8] sm:$0xff]
    %v1790 = vld [vmem:[%s4] sm:$0x3]
    %v1792 = vlaneseq
    %v1793 = vshrl.u32 %v1792, 7
    %v1794 = vsub.s32 0, %v1793
    %v1795 = vrot.slane %v1790, %v1794
    %v1796 = vlaneseq
    %v1797 = vshrl.u32 %v1796, 7
    %v1798 = vsub.s32 1, %v1797
    %v1799 = vrot.slane %v1790, %v1798
    %v1866 = vunpack.c.l.b16 %v1726
    %v1867 = vunpack.c.h.b16 %v1726
    %v1868 = vunpack.c.l.b16 %v1727
    %v1869 = vunpack.c.h.b16 %v1727
    %v1870 = vunpack.c.l.b16 %v1728
    %v1871 = vunpack.c.h.b16 %v1728
    %v1872 = vunpack.c.l.b16 %v1729
    %v1873 = vunpack.c.h.b16 %v1729
    %v1874 = vunpack.c.l.b16 %v1730
    %v1875 = vunpack.c.h.b16 %v1730
    %v1876 = vunpack.c.l.b16 %v1731
    %v1877 = vunpack.c.h.b16 %v1731
    %v1878 = vunpack.c.l.b16 %v1732
    %v1879 = vunpack.c.h.b16 %v1732
    %v1880 = vunpack.c.l.b16 %v1733
    %v1881 = vunpack.c.h.b16 %v1733
    %v1882 = vunpack.c.l.b16 %v1734
    %v1883 = vunpack.c.h.b16 %v1734
    %v1884 = vunpack.c.l.b16 %v1735
    %v1885 = vunpack.c.h.b16 %v1735
    %v1886 = vunpack.c.l.b16 %v1736
    %v1887 = vunpack.c.h.b16 %v1736
    %v1888 = vunpack.c.l.b16 %v1737
    %v1889 = vunpack.c.h.b16 %v1737
    %v1890 = vunpack.c.l.b16 %v1738
    %v1891 = vunpack.c.h.b16 %v1738
    %v1892 = vunpack.c.l.b16 %v1739
    %v1893 = vunpack.c.h.b16 %v1739
    %v1894 = vunpack.c.l.b16 %v1740
    %v1895 = vunpack.c.h.b16 %v1740
    %v1896 = vunpack.c.l.b16 %v1741
    %v1897 = vunpack.c.h.b16 %v1741
    %v1898 = vunpack.c.l.b16 %v1742
    %v1899 = vunpack.c.h.b16 %v1742
    %v1900 = vunpack.c.l.b16 %v1743
    %v1901 = vunpack.c.h.b16 %v1743
    %v1902 = vunpack.c.l.b16 %v1744
    %v1903 = vunpack.c.h.b16 %v1744
    %v1904 = vunpack.c.l.b16 %v1745
    %v1905 = vunpack.c.h.b16 %v1745
    %v1906 = vunpack.c.l.b16 %v1746
    %v1907 = vunpack.c.h.b16 %v1746
    %v1908 = vunpack.c.l.b16 %v1747
    %v1909 = vunpack.c.h.b16 %v1747
    %v1910 = vunpack.c.l.b16 %v1748
    %v1911 = vunpack.c.h.b16 %v1748
    %v1912 = vunpack.c.l.b16 %v1749
    %v1913 = vunpack.c.h.b16 %v1749
    %v1914 = vunpack.c.l.b16 %v1750
    %v1915 = vunpack.c.h.b16 %v1750
    %v1916 = vunpack.c.l.b16 %v1751
    %v1917 = vunpack.c.h.b16 %v1751
    %v1918 = vunpack.c.l.b16 %v1752
    %v1919 = vunpack.c.h.b16 %v1752
    %v1920 = vunpack.c.l.b16 %v1753
    %v1921 = vunpack.c.h.b16 %v1753
    %v1922 = vunpack.c.l.b16 %v1754
    %v1923 = vunpack.c.h.b16 %v1754
    %v1924 = vunpack.c.l.b16 %v1755
    %v1925 = vunpack.c.h.b16 %v1755
    %v1926 = vunpack.c.l.b16 %v1756
    %v1927 = vunpack.c.h.b16 %v1756
    %v1928 = vunpack.c.l.b16 %v1757
    %v1929 = vunpack.c.h.b16 %v1757
    %v1930 = vunpack.c.l.b16 %v1758
    %v1931 = vunpack.c.h.b16 %v1758
    %v1932 = vunpack.c.l.b16 %v1759
    %v1933 = vunpack.c.h.b16 %v1759
    %v1934 = vunpack.c.l.b16 %v1760
    %v1935 = vunpack.c.h.b16 %v1760
    %v1936 = vunpack.c.l.b16 %v1761
    %v1937 = vunpack.c.h.b16 %v1761
    %v1938 = vunpack.c.l.b16 %v1762
    %v1939 = vunpack.c.h.b16 %v1762
    %v1940 = vunpack.c.l.b16 %v1763
    %v1941 = vunpack.c.h.b16 %v1763
    %v1942 = vunpack.c.l.b16 %v1764
    %v1943 = vunpack.c.h.b16 %v1764
    %v1944 = vunpack.c.l.b16 %v1765
    %v1945 = vunpack.c.h.b16 %v1765
    %v1946 = vunpack.c.l.b16 %v1766
    %v1947 = vunpack.c.h.b16 %v1766
    %v1948 = vunpack.c.l.b16 %v1767
    %v1949 = vunpack.c.h.b16 %v1767
    %v1950 = vunpack.c.l.b16 %v1768
    %v1951 = vunpack.c.h.b16 %v1768
    %v1952 = vunpack.c.l.b16 %v1769
    %v1953 = vunpack.c.h.b16 %v1769
    %v1954 = vunpack.c.l.b16 %v1770
    %v1955 = vunpack.c.h.b16 %v1770
    %v1956 = vunpack.c.l.b16 %v1771
    %v1957 = vunpack.c.h.b16 %v1771
    %v1958 = vunpack.c.l.b16 %v1772
    %v1959 = vunpack.c.h.b16 %v1772
    %v1960 = vunpack.c.l.b16 %v1773
    %v1961 = vunpack.c.h.b16 %v1773
    %v1962 = vunpack.c.l.b16 %v1774
    %v1963 = vunpack.c.h.b16 %v1774
    %v1964 = vunpack.c.l.b16 %v1775
    %v1965 = vunpack.c.h.b16 %v1775
    %v1966 = vunpack.c.l.b16 %v1776
    %v1967 = vunpack.c.h.b16 %v1776
    %v1968 = vunpack.c.l.b16 %v1777
    %v1969 = vunpack.c.h.b16 %v1777
    %v1970 = vunpack.c.l.b16 %v1778
    %v1971 = vunpack.c.h.b16 %v1778
    %v1972 = vunpack.c.l.b16 %v1779
    %v1973 = vunpack.c.h.b16 %v1779
    %v1974 = vunpack.c.l.b16 %v1780
    %v1975 = vunpack.c.h.b16 %v1780
    %v1976 = vunpack.c.l.b16 %v1781
    %v1977 = vunpack.c.h.b16 %v1781
    %v1978 = vunpack.c.l.b16 %v1782
    %v1979 = vunpack.c.h.b16 %v1782
    %v1980 = vunpack.c.l.b16 %v1783
    %v1981 = vunpack.c.h.b16 %v1783
    %v1982 = vunpack.c.l.b16 %v1784
    %v1983 = vunpack.c.h.b16 %v1784
    %v1984 = vunpack.c.l.b16 %v1785
    %v1985 = vunpack.c.h.b16 %v1785
    %v1986 = vunpack.c.l.b16 %v1786
    %v1987 = vunpack.c.h.b16 %v1786
    %v1988 = vunpack.c.l.b16 %v1787
    %v1989 = vunpack.c.h.b16 %v1787
    %v1990 = vunpack.c.l.b16 %v1788
    %v1991 = vunpack.c.h.b16 %v1788
    %v1992 = vunpack.c.l.b16 %v1789
    %v1993 = vunpack.c.h.b16 %v1789
    %v1994 = vpack.c.b16 %v1868, %v1866
    %v1995 = vpack.c.b16 %v1869, %v1867
    %v1996 = vpack.c.b16 %v1872, %v1870
    %v1997 = vpack.c.b16 %v1873, %v1871
    %v1998 = vpack.c.b16 %v1876, %v1874
    %v1999 = vpack.c.b16 %v1877, %v1875
    %v2000 = vpack.c.b16 %v1880, %v1878
    %v2001 = vpack.c.b16 %v1881, %v1879
    %v2002 = vpack.c.b16 %v1884, %v1882
    %v2003 = vpack.c.b16 %v1885, %v1883
    %v2004 = vpack.c.b16 %v1888, %v1886
    %v2005 = vpack.c.b16 %v1889, %v1887
    %v2006 = vpack.c.b16 %v1892, %v1890
    %v2007 = vpack.c.b16 %v1893, %v1891
    %v2008 = vpack.c.b16 %v1896, %v1894
    %v2009 = vpack.c.b16 %v1897, %v1895
    %v2010 = vpack.c.b16 %v1900, %v1898
    %v2011 = vpack.c.b16 %v1901, %v1899
    %v2012 = vpack.c.b16 %v1904, %v1902
    %v2013 = vpack.c.b16 %v1905, %v1903
    %v2014 = vpack.c.b16 %v1908, %v1906
    %v2015 = vpack.c.b16 %v1909, %v1907
    %v2016 = vpack.c.b16 %v1912, %v1910
    %v2017 = vpack.c.b16 %v1913, %v1911
    %v2018 = vpack.c.b16 %v1916, %v1914
    %v2019 = vpack.c.b16 %v1917, %v1915
    %v2020 = vpack.c.b16 %v1920, %v1918
    %v2021 = vpack.c.b16 %v1921, %v1919
    %v2022 = vpack.c.b16 %v1924, %v1922
    %v2023 = vpack.c.b16 %v1925, %v1923
    %v2024 = vpack.c.b16 %v1928, %v1926
    %v2025 = vpack.c.b16 %v1929, %v1927
    %v2026 = vpack.c.b16 %v1932, %v1930
    %v2027 = vpack.c.b16 %v1933, %v1931
    %v2028 = vpack.c.b16 %v1936, %v1934
    %v2029 = vpack.c.b16 %v1937, %v1935
    %v2030 = vpack.c.b16 %v1940, %v1938
    %v2031 = vpack.c.b16 %v1941, %v1939
    %v2032 = vpack.c.b16 %v1944, %v1942
    %v2033 = vpack.c.b16 %v1945, %v1943
    %v2034 = vpack.c.b16 %v1948, %v1946
    %v2035 = vpack.c.b16 %v1949, %v1947
    %v2036 = vpack.c.b16 %v1952, %v1950
    %v2037 = vpack.c.b16 %v1953, %v1951
    %v2038 = vpack.c.b16 %v1956, %v1954
    %v2039 = vpack.c.b16 %v1957, %v1955
    %v2040 = vpack.c.b16 %v1960, %v1958
    %v2041 = vpack.c.b16 %v1961, %v1959
    %v2042 = vpack.c.b16 %v1964, %v1962
    %v2043 = vpack.c.b16 %v1965, %v1963
    %v2044 = vpack.c.b16 %v1968, %v1966
    %v2045 = vpack.c.b16 %v1969, %v1967
    %v2046 = vpack.c.b16 %v1972, %v1970
    %v2047 = vpack.c.b16 %v1973, %v1971
    %v2048 = vpack.c.b16 %v1976, %v1974
    %v2049 = vpack.c.b16 %v1977, %v1975
    %v2050 = vpack.c.b16 %v1980, %v1978
    %v2051 = vpack.c.b16 %v1981, %v1979
    %v2052 = vpack.c.b16 %v1984, %v1982
    %v2053 = vpack.c.b16 %v1985, %v1983
    %v2054 = vpack.c.b16 %v1988, %v1986
    %v2055 = vpack.c.b16 %v1989, %v1987
    %v2056 = vpack.c.b16 %v1992, %v1990
    %v2057 = vpack.c.b16 %v1993, %v1991
    %2122 = vmatprep.subr.bf16.mxu0 %v1995
    %2123 = vmatpush1.bf16.msra.mxu0 %v1994
    %2124 = vmatprep.subr.bf16.mxu0 %v1997
    %2125 = vmatpush1.bf16.msra.mxu0 %v1996
    %2126 = vmatprep.subr.bf16.mxu0 %v1999
    %2127 = vmatpush1.bf16.msra.mxu0 %v1998
    %2128 = vmatprep.subr.bf16.mxu0 %v2001
    %2129 = vmatpush1.bf16.msra.mxu0 %v2000
    %2130 = vmatprep.subr.bf16.mxu0 %v2003
    %2131 = vmatpush1.bf16.msra.mxu0 %v2002
    %2132 = vmatprep.subr.bf16.mxu0 %v2005
    %2133 = vmatpush1.bf16.msra.mxu0 %v2004
    %2134 = vmatprep.subr.bf16.mxu0 %v2007
    %2135 = vmatpush1.bf16.msra.mxu0 %v2006
    %2136 = vmatprep.subr.bf16.mxu0 %v2009
    %2137 = vmatpush1.bf16.msra.mxu0 %v2008
    %2138 = vmatprep.subr.bf16.mxu0 %v2011
    %2139 = vmatpush1.bf16.msra.mxu0 %v2010
    %2140 = vmatprep.subr.bf16.mxu0 %v2013
    %2141 = vmatpush1.bf16.msra.mxu0 %v2012
    %2142 = vmatprep.subr.bf16.mxu0 %v2015
    %2143 = vmatpush1.bf16.msra.mxu0 %v2014
    %2144 = vmatprep.subr.bf16.mxu0 %v2017
    %2145 = vmatpush1.bf16.msra.mxu0 %v2016
    %2146 = vmatprep.subr.bf16.mxu0 %v2019
    %2147 = vmatpush1.bf16.msra.mxu0 %v2018
    %2148 = vmatprep.subr.bf16.mxu0 %v2021
    %2149 = vmatpush1.bf16.msra.mxu0 %v2020
    %2150 = vmatprep.subr.bf16.mxu0 %v2023
    %2151 = vmatpush1.bf16.msra.mxu0 %v2022
    %2152 = vmatprep.subr.bf16.mxu0 %v2025
    %2153 = vmatpush1.bf16.msra.mxu0 %v2024
    %2154 = vmatprep.mubr.bf16.mxu0 %v1723
    %2155 = vmatmul.mubr.bf16.gmra.mrb[0].mxu0 %v1722
    %v2156 = vpop.f32.mrb[0].mxu0
    %v2157 = vadd.f32 %v1795, %v2156
    %v2158 = vpop.f32.mrb[0].mxu0
    %v2159 = vadd.f32 %v1799, %v2158
    %v2160 = vpop.f32.mrb[0].mxu0
    %v2161 = vpop.f32.mrb[0].mxu0
    %2162 = vdwg.mxu0
    %2163 = vmatprep.subr.bf16.mxu0 %v2027
    %2164 = vmatpush1.bf16.msra.mxu0 %v2026
    %2165 = vmatprep.subr.bf16.mxu0 %v2029
    %2166 = vmatpush1.bf16.msra.mxu0 %v2028
    %2167 = vmatprep.subr.bf16.mxu0 %v2031
    %2168 = vmatpush1.bf16.msra.mxu0 %v2030
    %2169 = vmatprep.subr.bf16.mxu0 %v2033
    %2170 = vmatpush1.bf16.msra.mxu0 %v2032
    %2171 = vmatprep.subr.bf16.mxu0 %v2035
    %2172 = vmatpush1.bf16.msra.mxu0 %v2034
    %2173 = vmatprep.subr.bf16.mxu0 %v2037
    %2174 = vmatpush1.bf16.msra.mxu0 %v2036
    %2175 = vmatprep.subr.bf16.mxu0 %v2039
    %2176 = vmatpush1.bf16.msra.mxu0 %v2038
    %2177 = vmatprep.subr.bf16.mxu0 %v2041
    %2178 = vmatpush1.bf16.msra.mxu0 %v2040
    %2179 = vmatprep.subr.bf16.mxu0 %v2043
    %2180 = vmatpush1.bf16.msra.mxu0 %v2042
    %2181 = vmatprep.subr.bf16.mxu0 %v2045
    %2182 = vmatpush1.bf16.msra.mxu0 %v2044
    %2183 = vmatprep.subr.bf16.mxu0 %v2047
    %2184 = vmatpush1.bf16.msra.mxu0 %v2046
    %2185 = vmatprep.subr.bf16.mxu0 %v2049
    %2186 = vmatpush1.bf16.msra.mxu0 %v2048
    %2187 = vmatprep.subr.bf16.mxu0 %v2051
    %2188 = vmatpush1.bf16.msra.mxu0 %v2050
    %2189 = vmatprep.subr.bf16.mxu0 %v2053
    %2190 = vmatpush1.bf16.msra.mxu0 %v2052
    %2191 = vmatprep.subr.bf16.mxu0 %v2055
    %2192 = vmatpush1.bf16.msra.mxu0 %v2054
    %2193 = vmatprep.subr.bf16.mxu0 %v2057
    %2194 = vmatpush1.bf16.msra.mxu0 %v2056
    %2195 = vmatprep.mubr.bf16.mxu0 %v1725
    %2196 = vmatmul.mubr.bf16.gmra.mrb[0].mxu0 %v1724
    %v2197 = vpop.f32.mrb[0].mxu0
    %v2198 = vadd.f32 %v2157, %v2197
    %v2199 = vpop.f32.mrb[0].mxu0
    %v2200 = vadd.f32 %v2159, %v2199
    %v2201 = vpop.f32.mrb[0].mxu0
    %v2202 = vpop.f32.mrb[0].mxu0
    %2203 = vdwg.mxu0
    %v2204 = vmul.f32 %v2198, 0.2
    %v2205 = vmul.f32 %v2200, 0.2
    %v2206 = vmax.f32 %v2198, %v2204
    %v2207 = vmax.f32 %v2200, %v2205
    %v2208 = vpack.c.bf16 %v2206, %v2206
    %v2209 = vpack.c.bf16 %v2207, %v2207
    %v2210 = vld [vmem:[#allocation8] sm:$0xf]
    %v2211 = vld [vmem:[#allocation8 + $0x4] sm:$0xf]
    %v2212 = vld [vmem:[#allocation8 + $0x8] sm:$0xf]
    %v2213 = vld [vmem:[#allocation8 + $0xc] sm:$0xf]
    %v2214 = vld [vmem:[#allocation8 + $0x10] sm:$0xf]
    %v2215 = vld [vmem:[#allocation8 + $0x14] sm:$0xf]
    %v2216 = vld [vmem:[#allocation8 + $0x18] sm:$0xf]
    %v2217 = vld [vmem:[#allocation8 + $0x1c] sm:$0xf]
    %v2218 = vld [vmem:[#allocation8 + $0x20] sm:$0xf]
    %v2219 = vld [vmem:[#allocation8 + $0x24] sm:$0xf]
    %v2220 = vld [vmem:[#allocation8 + $0x28] sm:$0xf]
    %v2221 = vld [vmem:[#allocation8 + $0x2c] sm:$0xf]
    %v2222 = vld [vmem:[#allocation8 + $0x30] sm:$0xf]
    %v2223 = vld [vmem:[#allocation8 + $0x34] sm:$0xf]
    %v2224 = vld [vmem:[#allocation8 + $0x38] sm:$0xf]
    %v2225 = vld [vmem:[#allocation8 + $0x3c] sm:$0xf]
    %v2226 = vld [vmem:[#allocation8 + $0x40] sm:$0xf]
    %v2227 = vld [vmem:[#allocation8 + $0x44] sm:$0xf]
    %v2228 = vld [vmem:[#allocation8 + $0x48] sm:$0xf]
    %v2229 = vld [vmem:[#allocation8 + $0x4c] sm:$0xf]
    %v2230 = vld [vmem:[#allocation8 + $0x50] sm:$0xf]
    %v2231 = vld [vmem:[#allocation8 + $0x54] sm:$0xf]
    %v2232 = vld [vmem:[#allocation8 + $0x58] sm:$0xf]
    %v2233 = vld [vmem:[#allocation8 + $0x5c] sm:$0xf]
    %v2234 = vld [vmem:[#allocation8 + $0x60] sm:$0xf]
    %v2235 = vld [vmem:[#allocation8 + $0x64] sm:$0xf]
    %v2236 = vld [vmem:[#allocation8 + $0x68] sm:$0xf]
    %v2237 = vld [vmem:[#allocation8 + $0x6c] sm:$0xf]
    %v2238 = vld [vmem:[#allocation8 + $0x70] sm:$0xf]
    %v2239 = vld [vmem:[#allocation8 + $0x74] sm:$0xf]
    %v2240 = vld [vmem:[#allocation8 + $0x78] sm:$0xf]
    %v2241 = vld [vmem:[#allocation8 + $0x7c] sm:$0xf]
    %v2242 = vld [vmem:[%s6] sm:$0x1]
    %v2244 = vlaneseq
    %v2245 = vshrl.u32 %v2244, 7
    %v2246 = vsub.s32 0, %v2245
    %v2247 = vrot.slane %v2242, %v2246
    %v2281 = vunpack.c.l.b16 %v2210
    %v2282 = vunpack.c.l.b16 %v2211
    %v2283 = vunpack.c.l.b16 %v2212
    %v2284 = vunpack.c.l.b16 %v2213
    %v2285 = vunpack.c.l.b16 %v2214
    %v2286 = vunpack.c.l.b16 %v2215
    %v2287 = vunpack.c.l.b16 %v2216
    %v2288 = vunpack.c.l.b16 %v2217
    %v2289 = vunpack.c.l.b16 %v2218
    %v2290 = vunpack.c.l.b16 %v2219
    %v2291 = vunpack.c.l.b16 %v2220
    %v2292 = vunpack.c.l.b16 %v2221
    %v2293 = vunpack.c.l.b16 %v2222
    %v2294 = vunpack.c.l.b16 %v2223
    %v2295 = vunpack.c.l.b16 %v2224
    %v2296 = vunpack.c.l.b16 %v2225
    %v2297 = vunpack.c.l.b16 %v2226
    %v2298 = vunpack.c.l.b16 %v2227
    %v2299 = vunpack.c.l.b16 %v2228
    %v2300 = vunpack.c.l.b16 %v2229
    %v2301 = vunpack.c.l.b16 %v2230
    %v2302 = vunpack.c.l.b16 %v2231
    %v2303 = vunpack.c.l.b16 %v2232
    %v2304 = vunpack.c.l.b16 %v2233
    %v2305 = vunpack.c.l.b16 %v2234
    %v2306 = vunpack.c.l.b16 %v2235
    %v2307 = vunpack.c.l.b16 %v2236
    %v2308 = vunpack.c.l.b16 %v2237
    %v2309 = vunpack.c.l.b16 %v2238
    %v2310 = vunpack.c.l.b16 %v2239
    %v2311 = vunpack.c.l.b16 %v2240
    %v2312 = vunpack.c.l.b16 %v2241
    %v2313 = vpack.c.b16 %v2282, %v2281
    %v2314 = vpack.c.b16 %v2284, %v2283
    %v2315 = vpack.c.b16 %v2286, %v2285
    %v2316 = vpack.c.b16 %v2288, %v2287
    %v2317 = vpack.c.b16 %v2290, %v2289
    %v2318 = vpack.c.b16 %v2292, %v2291
    %v2319 = vpack.c.b16 %v2294, %v2293
    %v2320 = vpack.c.b16 %v2296, %v2295
    %v2321 = vpack.c.b16 %v2298, %v2297
    %v2322 = vpack.c.b16 %v2300, %v2299
    %v2323 = vpack.c.b16 %v2302, %v2301
    %v2324 = vpack.c.b16 %v2304, %v2303
    %v2325 = vpack.c.b16 %v2306, %v2305
    %v2326 = vpack.c.b16 %v2308, %v2307
    %v2327 = vpack.c.b16 %v2310, %v2309
    %v2328 = vpack.c.b16 %v2312, %v2311
    %2345 = vmatprep.subr.bf16.mxu0 0
    %2346 = vmatpush1.bf16.msra.mxu0 %v2313
    %2347 = vmatprep.subr.bf16.mxu0 0
    %2348 = vmatpush1.bf16.msra.mxu0 %v2314
    %2349 = vmatprep.subr.bf16.mxu0 0
    %2350 = vmatpush1.bf16.msra.mxu0 %v2315
    %2351 = vmatprep.subr.bf16.mxu0 0
    %2352 = vmatpush1.bf16.msra.mxu0 %v2316
    %2353 = vmatprep.subr.bf16.mxu0 0
    %2354 = vmatpush1.bf16.msra.mxu0 %v2317
    %2355 = vmatprep.subr.bf16.mxu0 0
    %2356 = vmatpush1.bf16.msra.mxu0 %v2318
    %2357 = vmatprep.subr.bf16.mxu0 0
    %2358 = vmatpush1.bf16.msra.mxu0 %v2319
    %2359 = vmatprep.subr.bf16.mxu0 0
    %2360 = vmatpush1.bf16.msra.mxu0 %v2320
    %2361 = vmatprep.subr.bf16.mxu0 0
    %2362 = vmatpush1.bf16.msra.mxu0 %v2321
    %2363 = vmatprep.subr.bf16.mxu0 0
    %2364 = vmatpush1.bf16.msra.mxu0 %v2322
    %2365 = vmatprep.subr.bf16.mxu0 0
    %2366 = vmatpush1.bf16.msra.mxu0 %v2323
    %2367 = vmatprep.subr.bf16.mxu0 0
    %2368 = vmatpush1.bf16.msra.mxu0 %v2324
    %2369 = vmatprep.subr.bf16.mxu0 0
    %2370 = vmatpush1.bf16.msra.mxu0 %v2325
    %2371 = vmatprep.subr.bf16.mxu0 0
    %2372 = vmatpush1.bf16.msra.mxu0 %v2326
    %2373 = vmatprep.subr.bf16.mxu0 0
    %2374 = vmatpush1.bf16.msra.mxu0 %v2327
    %2375 = vmatprep.subr.bf16.mxu0 0
    %2376 = vmatpush1.bf16.msra.mxu0 %v2328
    %2377 = vmatprep.mubr.bf16.mxu0 %v2209
    %2378 = vmatmul.mubr.bf16.gmra.mrb[0].mxu0 %v2208
    %v2379 = vpop.f32.mrb[0].mxu0
    %v2380 = vadd.f32 %v2247, %v2379
    %v2381 = vpop.f32.mrb[0].mxu0
    %v2382 = vpop.f32.mrb[0].mxu0
    %v2383 = vpop.f32.mrb[0].mxu0
    %2384 = vdwg.mxu0
    %v2385 = vsub.f32 0.0, %v2380
    %v2386 = vmul.f32 %v2385, 1.442695
    %v2387 = vpow.pop %v2386
    %v2388 = vadd.f32 %v2387, 1.0
    %v2389 = vrcp.pop %v2388
    %2390 = vst [vmem:[#allocation10] sm:$0xff] %v2389
    // Predicated region
    $region46: #{tpu_custom_call.1} parent=1 // pred_check
      _
    $region47: #{tpu_custom_call.1} parent=1 // pred_check_branch
      %2392 = sbr.rel (0) target = $region49
    $region48: #{tpu_custom_call.1} parent=1 // pred_region
      %s2394 = ssub.s32 128, 32
      %2395 = vsyncadd [#allocation4], %s2394
      %s2396 = sshll.u32 [#allocation10], 4
      %s2397 = int_to_ptr.vmem [resolvable:$true] %s2396
      %2402 = dma.vmem_to_hbm [thread:$0]  %s2397, 32, %s7, [#allocation4], 32, 32, 2
    $region49: #{tpu_custom_call.1} parent=1 // pred_fallthru
      _
    // Predicated region
    $region50: #{tpu_custom_call.1} parent=1 // pred_check
      _
    $region51: #{tpu_custom_call.1} parent=1 // pred_check_branch
      %2404 = sbr.rel (0) target = $region53
    $region52: #{tpu_custom_call.1} parent=1 // pred_region
      %2405 = dma.done [#allocation4], 128
    $region53: #{tpu_custom_call.1} parent=1 // pred_fallthru
      _
    %2406 = vsyncpa [#allocation3], 1
    %2407 = vsyncpa [#allocation6], 1
    %2408 = vsyncpa [#allocation9], 1
    %2409 = vsyncpa [#allocation4], 1

</llo_original>
